<compile_context>
chip_gen: v6e
topology: v6e:2x2x1
jax: 0.10.0
libtpu: 0.0.40
codegen_flags: <defaults>
</compile_context>

<pallas_src>
import math

import jax
import jax.numpy as jnp
from jax import lax
from jax.experimental import pallas as pl
from jax.experimental.pallas import tpu as pltpu

# ----------------------------- config (small) -------------------------------
VOCAB = 100
HIDDEN = 32
LAYERS = 2
HEADS = 2
HEAD_DIM = HIDDEN // HEADS
INTERMEDIATE = 64
MAX_POS = 16
SEQ = 8
BATCH = 2
LEX_DIM = 21
NUM_EMO = 4          # ['joy', 'sadness', 'anger', 'fear']
LANE = 128

_VMEM = pl.BlockSpec(memory_space=pltpu.MemorySpace.VMEM)


# ------------------------------ fused kernel ---------------------------------
def _layernorm(x, g, b, eps=1e-12):
    # single-pass variance (one fewer XLU reduction chain than two-pass form).
    mu = jnp.mean(x, axis=-1, keepdims=True)
    ex2 = jnp.mean(x * x, axis=-1, keepdims=True)
    var = jnp.maximum(ex2 - mu * mu, 0.0)
    return (x - mu) * lax.rsqrt(var + eps) * g + b


def _fused_forward_kernel(ids_ref, addmask_ref, lex_ref,
                          word_emb_ref, pos_tok_ref,
                          wqkv_ref, wo_ref, wi_ref, wf_ref,
                          lvec_ref, misc_ref, head_w_ref,
                          out_ref):
    f32 = jnp.float32
    bf16 = jnp.bfloat16
    BS = BATCH * SEQ

    mv = misc_ref[...]                               # (8, 128) f32
    emb_ln_g = mv[0:1, 0:HIDDEN]
    emb_ln_b = mv[1:2, 0:HIDDEN]
    pool_b = mv[2:3, 0:HIDDEN]
    b_shared = mv[3:4, 0:HIDDEN]
    b_head = mv[4:5, 0:HIDDEN]                       # real values in lanes [0, 2*NUM_EMO)

    # ---- embeddings: one-hot gather on the MXU + precomputed pos/token add ---
    ids = ids_ref[...]                                               # (BS, 1) int32
    vocab_iota = lax.broadcasted_iota(jnp.int32, (BS, VOCAB), 1)
    one_hot = (vocab_iota == ids).astype(f32).astype(bf16)           # (BS, VOCAB)
    word = jnp.dot(one_hot, word_emb_ref[...], preferred_element_type=f32)
    x = _layernorm(word + pos_tok_ref[...], emb_ln_g, emb_ln_b)      # (BS, H) f32

    addmask = addmask_ref[...]                       # (BS, BS): block-diag + padding
    scale = 1.0 / math.sqrt(HEAD_DIM)
    dn_qkT = (((1,), (1,)), ((), ()))                # contract last dims (no k.T copy)

    # ---------------------------- encoder layers ------------------------------
    for li in range(LAYERS):
        lv = lvec_ref[li]                            # (8, 128) f32
        bqkv = lv[0:1, 0:3 * HIDDEN]
        bo = lv[1:2, 0:HIDDEN]
        bi = lv[2:3, 0:INTERMEDIATE]
        bf_ = lv[3:4, 0:HIDDEN]
        ln1_g, ln1_b = lv[4:5, 0:HIDDEN], lv[5:6, 0:HIDDEN]
        ln2_g, ln2_b = lv[6:7, 0:HIDDEN], lv[7:8, 0:HIDDEN]

        # fused QKV projection: one (BS, H) @ (H, 3H) matmul (bf16 -> f32 acc)
        qkv = jnp.dot(x.astype(bf16), wqkv_ref[li], preferred_element_type=f32) + bqkv

        # per-head attention over ALL B*S rows at once; cross-batch entries are
        # killed by the block-diagonal additive mask. Output projection is
        # accumulated per head against W_o row slices -> no concatenates.
        attn_out = jnp.zeros((BS, HIDDEN), f32)
        for h in range(HEADS):
            c0 = h * HEAD_DIM
            q = qkv[:, c0:c0 + HEAD_DIM].astype(bf16)
            k = qkv[:, HIDDEN + c0:HIDDEN + c0 + HEAD_DIM].astype(bf16)
            v = qkv[:, 2 * HIDDEN + c0:2 * HIDDEN + c0 + HEAD_DIM].astype(bf16)
            s = lax.dot_general(q, k, dn_qkT, preferred_element_type=f32)
            s = s * scale + addmask
            s = s - jnp.max(s, axis=-1, keepdims=True)
            p = jnp.exp(s)
            p = p * pl.reciprocal(jnp.sum(p, axis=-1, keepdims=True), approx=True)
            ctx = jnp.dot(p.astype(bf16), v, preferred_element_type=f32)   # (BS, D)
            attn_out = attn_out + jnp.dot(
                ctx.astype(bf16), wo_ref[li, c0:c0 + HEAD_DIM, :],
                preferred_element_type=f32)
        x = _layernorm(x + attn_out + bo, ln1_g, ln1_b)

        # feed-forward
        inter = jax.nn.gelu(
            jnp.dot(x.astype(bf16), wi_ref[li], preferred_element_type=f32) + bi)
        ffn = jnp.dot(inter.astype(bf16), wf_ref[li], preferred_element_type=f32) + bf_
        x = _layernorm(x + ffn, ln2_g, ln2_b)

    # ---- pooler: [CLS] rows via one-hot select matmul (no concats) -----------
    row_iota = lax.broadcasted_iota(jnp.int32, (BATCH, BS), 0)
    col_iota = lax.broadcasted_iota(jnp.int32, (BATCH, BS), 1)
    cls_sel = (col_iota == row_iota * SEQ).astype(f32).astype(bf16)   # (B, BS)
    cls_rows = jnp.dot(cls_sel, x.astype(bf16), preferred_element_type=f32)
    pooled = jnp.tanh(
        jnp.dot(cls_rows.astype(bf16), head_w_ref[0:HIDDEN, :],
                preferred_element_type=f32) + pool_b)

    # ----------------------------- multi-task head ----------------------------
    # concat([pooled, lex]) @ W_shared == pooled @ W[:H] + lex @ W[H:]
    shared = (jnp.dot(pooled.astype(bf16), head_w_ref[HIDDEN:2 * HIDDEN, :],
                      preferred_element_type=f32)
              + jnp.dot(lex_ref[...].astype(bf16),
                        head_w_ref[2 * HIDDEN:3 * HIDDEN, :],
                        preferred_element_type=f32)
              + b_shared)
    shared = jnp.maximum(shared, 0.0)        # F.relu; Dropout(0.3) = identity (eval)
    # classifier + regressor merged into one matmul (cols >= 2*NUM_EMO are zero pad)
    logits = jnp.dot(shared.astype(bf16), head_w_ref[3 * HIDDEN:4 * HIDDEN, :],
                     preferred_element_type=f32) + b_head
    out_ref[:, 0:NUM_EMO] = jax.nn.sigmoid(logits[:, 0:NUM_EMO])          # torch.sigmoid
    out_ref[:, NUM_EMO:2 * NUM_EMO] = (jnp.tanh(logits[:, NUM_EMO:2 * NUM_EMO]) + 1.0) * 0.5


# ------------------------------ parameter init --------------------------------
def _dense(key, fan_in, fan_out):
    w = jax.random.normal(key, (fan_in, fan_out), jnp.float32) * 0.02
    b = jnp.zeros((1, fan_out), jnp.float32)
    return w, b


def init_params(key):
    keys = jax.random.split(key, 8 + LAYERS)
    p = {}
    p["word_emb"] = jax.random.normal(keys[0], (VOCAB, HIDDEN), jnp.float32) * 0.02
    p["pos_emb"] = jax.random.normal(keys[1], (MAX_POS, HIDDEN), jnp.float32) * 0.02
    p["tok_emb"] = jax.random.normal(keys[2], (2, HIDDEN), jnp.float32) * 0.02
    p["emb_ln_g"] = jnp.ones((1, HIDDEN), jnp.float32)
    p["emb_ln_b"] = jnp.zeros((1, HIDDEN), jnp.float32)

    stacks = {k: [] for k in ("wqkv", "bqkv", "wo", "bo", "ln1_g", "ln1_b",
                              "wi", "bi", "wf", "bf", "ln2_g", "ln2_b")}
    for li in range(LAYERS):
        lk = jax.random.split(keys[3 + li], 6)
        wq, bq = _dense(lk[0], HIDDEN, HIDDEN)
        wk, bk = _dense(lk[1], HIDDEN, HIDDEN)
        wv, bv = _dense(lk[2], HIDDEN, HIDDEN)
        stacks["wqkv"].append(jnp.concatenate([wq, wk, wv], axis=1))   # (H, 3H)
        stacks["bqkv"].append(jnp.concatenate([bq, bk, bv], axis=1))   # (1, 3H)
        wo, bo = _dense(lk[3], HIDDEN, HIDDEN)
        wi, bi = _dense(lk[4], HIDDEN, INTERMEDIATE)
        wf, bf = _dense(lk[5], INTERMEDIATE, HIDDEN)
        stacks["wo"].append(wo); stacks["bo"].append(bo)
        stacks["wi"].append(wi); stacks["bi"].append(bi)
        stacks["wf"].append(wf); stacks["bf"].append(bf)
        stacks["ln1_g"].append(jnp.ones((1, HIDDEN), jnp.float32))
        stacks["ln1_b"].append(jnp.zeros((1, HIDDEN), jnp.float32))
        stacks["ln2_g"].append(jnp.ones((1, HIDDEN), jnp.float32))
        stacks["ln2_b"].append(jnp.zeros((1, HIDDEN), jnp.float32))
    for k, v in stacks.items():
        p[k] = jnp.stack(v, axis=0)                                    # (LAYERS, ...)

    p["pool_w"], p["pool_b"] = _dense(keys[3 + LAYERS], HIDDEN, HIDDEN)

    # head: nn.Linear(hidden + lex_dim, hidden) split along the input axis
    w_shared, b_shared = _dense(keys[4 + LAYERS], HIDDEN + LEX_DIM, HIDDEN)
    p["w_shared_p"] = w_shared[:HIDDEN]
    p["w_shared_l"] = w_shared[HIDDEN:]
    p["b_shared"] = b_shared
    w_cls, b_cls = _dense(keys[5 + LAYERS], HIDDEN, NUM_EMO)
    w_reg, b_reg = _dense(keys[6 + LAYERS], HIDDEN, NUM_EMO)
    p["w_head"] = jnp.concatenate([w_cls, w_reg], axis=1)              # (H, 2*NE)
    p["b_head"] = jnp.concatenate([b_cls, b_reg], axis=1)              # (1, 2*NE)
    return p


def _pad_row(v, width=LANE):
    v = jnp.asarray(v, jnp.float32).reshape(1, -1)
    return jnp.pad(v, ((0, 0), (0, width - v.shape[1])))


def pack_params(p):
    """Pack 27 logical params into 10 VMEM slabs (done once, outside jit)."""
    bf16 = jnp.bfloat16
    packed = {}
    packed["word_emb"] = p["word_emb"].astype(bf16)                    # (V, H)
    # position + token-type embedding hoisted out of the kernel
    packed["pos_tok"] = (jnp.tile(p["pos_emb"][:SEQ], (BATCH, 1))
                         + p["tok_emb"][0:1]).astype(jnp.float32)      # (B*S, H)

    packed["wqkv"] = p["wqkv"].astype(bf16)                            # (L, H, 3H)
    packed["wo"] = p["wo"].astype(bf16)                                # (L, H, H)
    packed["wi"] = p["wi"].astype(bf16)                                # (L, H, I)
    packed["wf"] = p["wf"].astype(bf16)                                # (L, I, H)

    # per-layer small vectors -> one (LAYERS, 8, 128) f32 slab
    lv = []
    for li in range(LAYERS):
        rows = [_pad_row(p["bqkv"][li]), _pad_row(p["bo"][li]),
                _pad_row(p["bi"][li]), _pad_row(p["bf"][li]),
                _pad_row(p["ln1_g"][li]), _pad_row(p["ln1_b"][li]),
                _pad_row(p["ln2_g"][li]), _pad_row(p["ln2_b"][li])]
        lv.append(jnp.concatenate(rows, axis=0))
    packed["layer_vecs"] = jnp.stack(lv, axis=0)                       # (L, 8, 128)

    # misc small vectors -> one (8, 128) f32 slab
    misc_rows = [_pad_row(p["emb_ln_g"]), _pad_row(p["emb_ln_b"]),
                 _pad_row(p["pool_b"]), _pad_row(p["b_shared"]),
                 _pad_row(p["b_head"])]
    misc_rows += [jnp.zeros((1, LANE), jnp.float32)] * (8 - len(misc_rows))
    packed["misc_vecs"] = jnp.concatenate(misc_rows, axis=0)           # (8, 128)

    # pooler + head matmul weights -> one (4H, H) bf16 slab
    w_shared_l_pad = jnp.pad(p["w_shared_l"], ((0, HIDDEN - LEX_DIM), (0, 0)))
    w_head_pad = jnp.pad(p["w_head"], ((0, 0), (0, HIDDEN - 2 * NUM_EMO)))
    packed["head_w"] = jnp.concatenate(
        [p["pool_w"], p["w_shared_p"], w_shared_l_pad, w_head_pad], axis=0).astype(bf16)
    return packed


# ------------------------------ model forward ----------------------------------
def emotion_model_forward(packed, input_ids, attention_mask, lexicon_feats):
    B, S = input_ids.shape
    assert (B, S) == (BATCH, SEQ)
    ids = input_ids.reshape(B * S, 1).astype(jnp.int32)

    # additive attention mask over flattened rows: block-diagonal per batch
    # (so per-head attention can be computed over all B*S rows at once) plus
    # key-padding mask. Computed once in the wrapper (input plumbing).
    batch_idx = jnp.arange(B * S, dtype=jnp.int32) // S
    same_batch = batch_idx[:, None] == batch_idx[None, :]
    key_valid = (attention_mask.reshape(B * S) > 0)[None, :]
    addmask = jnp.where(same_batch & key_valid, 0.0, -1e9).astype(jnp.float32)

    lex_pad = jnp.pad(lexicon_feats.astype(jnp.float32),
                      ((0, 0), (0, HIDDEN - LEX_DIM)))                 # (B, H)

    out = pl.pallas_call(
        _fused_forward_kernel,
        out_shape=jax.ShapeDtypeStruct((B, 2 * NUM_EMO), jnp.float32),
        in_specs=[_VMEM] * 12,
        out_specs=_VMEM,
    )(ids, addmask, lex_pad,
      packed["word_emb"], packed["pos_tok"],
      packed["wqkv"], packed["wo"], packed["wi"], packed["wf"],
      packed["layer_vecs"], packed["misc_vecs"], packed["head_w"])

    return out[:, :NUM_EMO], out[:, NUM_EMO:]


# ----------------------------------- main ---------------------------------------
if __name__ == "__main__":
    root = jax.random.PRNGKey(0)
    k_params, k_ids, k_lex = jax.random.split(root, 3)

    params = init_params(k_params)
    packed = pack_params(params)

    input_ids = jax.random.randint(k_ids, (BATCH, SEQ), 0, VOCAB, dtype=jnp.int32)
    attention_mask = jnp.array(
        [[1, 1, 1, 1, 1, 1, 1, 1],
         [1, 1, 1, 1, 1, 0, 0, 0]], dtype=jnp.int32)
    lexicon_feats = jax.random.normal(k_lex, (BATCH, LEX_DIM), jnp.float32)

    fwd = jax.jit(emotion_model_forward)
    cls_probs, reg_output = fwd(packed, input_ids, attention_mask, lexicon_feats)
    cls_probs, reg_output = jax.block_until_ready((cls_probs, reg_output))

    assert cls_probs.shape == (BATCH, NUM_EMO) and reg_output.shape == (BATCH, NUM_EMO)
    assert bool(jnp.all(jnp.isfinite(cls_probs))) and bool(jnp.all(jnp.isfinite(reg_output)))
    assert bool(jnp.all((cls_probs >= 0) & (cls_probs <= 1)))
    assert bool(jnp.all((reg_output >= 0) & (reg_output <= 1)))
    print("KERNEL_OK")
</pallas_src>

<mosaic_0001>
module attributes {stable_mosaic.version = 11 : i64} {
  func.func @_fused_forward_kernel(%arg0: memref<16x1xi32, #tpu.memory_space<vmem>>, %arg1: memref<16x16xf32, #tpu.memory_space<vmem>>, %arg2: memref<2x32xf32, #tpu.memory_space<vmem>>, %arg3: memref<100x32xbf16, #tpu.memory_space<vmem>>, %arg4: memref<16x32xf32, #tpu.memory_space<vmem>>, %arg5: memref<2x32x96xbf16, #tpu.memory_space<vmem>>, %arg6: memref<2x32x32xbf16, #tpu.memory_space<vmem>>, %arg7: memref<2x32x64xbf16, #tpu.memory_space<vmem>>, %arg8: memref<2x64x32xbf16, #tpu.memory_space<vmem>>, %arg9: memref<2x8x128xf32, #tpu.memory_space<vmem>>, %arg10: memref<8x128xf32, #tpu.memory_space<vmem>>, %arg11: memref<128x32xbf16, #tpu.memory_space<vmem>>, %arg12: memref<2x8xf32, #tpu.memory_space<vmem>>) attributes {dimension_semantics = [], scalar_prefetch = 0 : i64, scratch_operands = 0 : i64, tpu.core_type = #tpu.core_type<tc>} {
    %c0 = arith.constant 0 : index
    %c0_0 = arith.constant 0 : index
    %0 = vector.load %arg10[%c0, %c0_0] : memref<8x128xf32, #tpu.memory_space<vmem>>, vector<8x128xf32>
    %1 = vector.extract_strided_slice %0 {offsets = [0, 0], sizes = [1, 32], strides = [1, 1]} : vector<8x128xf32> to vector<1x32xf32>
    %2 = vector.extract_strided_slice %0 {offsets = [1, 0], sizes = [1, 32], strides = [1, 1]} : vector<8x128xf32> to vector<1x32xf32>
    %3 = vector.extract_strided_slice %0 {offsets = [2, 0], sizes = [1, 32], strides = [1, 1]} : vector<8x128xf32> to vector<1x32xf32>
    %4 = vector.extract_strided_slice %0 {offsets = [3, 0], sizes = [1, 32], strides = [1, 1]} : vector<8x128xf32> to vector<1x32xf32>
    %5 = vector.extract_strided_slice %0 {offsets = [4, 0], sizes = [1, 32], strides = [1, 1]} : vector<8x128xf32> to vector<1x32xf32>
    %c0_1 = arith.constant 0 : index
    %c0_2 = arith.constant 0 : index
    %6 = vector.load %arg0[%c0_1, %c0_2] : memref<16x1xi32, #tpu.memory_space<vmem>>, vector<16x1xi32>
    %7 = tpu.iota {dimensions = array<i32: 1>} : vector<16x100xi32>
    %8 = vector.broadcast %6 : vector<16x1xi32> to vector<16x100xi32>
    %9 = arith.cmpi eq, %7, %8 : vector<16x100xi32>
    %10 = arith.extui %9 : vector<16x100xi1> to vector<16x100xi32>
    %11 = arith.sitofp %10 : vector<16x100xi32> to vector<16x100xf32>
    %12 = arith.truncf %11 : vector<16x100xf32> to vector<16x100xbf16>
    %c0_3 = arith.constant 0 : index
    %c0_4 = arith.constant 0 : index
    %13 = vector.load %arg3[%c0_3, %c0_4] : memref<100x32xbf16, #tpu.memory_space<vmem>>, vector<100x32xbf16>
    %cst = arith.constant dense<0.000000e+00> : vector<16x32xf32>
    %14 = tpu.matmul %12, %13, %cst {dimension_numbers = #tpu.dot_dimension_numbers<[1], [0], [0], [1], [0, 0, 1, 1], [], []>} : vector<16x100xbf16>, vector<100x32xbf16>, vector<16x32xf32> -> vector<16x32xf32>
    %c0_5 = arith.constant 0 : index
    %c0_6 = arith.constant 0 : index
    %15 = vector.load %arg4[%c0_5, %c0_6] : memref<16x32xf32, #tpu.memory_space<vmem>>, vector<16x32xf32>
    %16 = arith.addf %14, %15 : vector<16x32xf32>
    %cst_7 = arith.constant dense<0.000000e+00> : vector<16xf32>
    %17 = vector.multi_reduction <add>, %16, %cst_7 [1] : vector<16x32xf32> to vector<16xf32>
    %18 = vector.shape_cast %17 : vector<16xf32> to vector<16x1xf32>
    %cst_8 = arith.constant 3.200000e+01 : f32
    %19 = vector.broadcast %cst_8 : f32 to vector<16x1xf32>
    %20 = arith.divf %18, %19 : vector<16x1xf32>
    %21 = arith.mulf %16, %16 : vector<16x32xf32>
    %cst_9 = arith.constant dense<0.000000e+00> : vector<16xf32>
    %22 = vector.multi_reduction <add>, %21, %cst_9 [1] : vector<16x32xf32> to vector<16xf32>
    %23 = vector.shape_cast %22 : vector<16xf32> to vector<16x1xf32>
    %cst_10 = arith.constant 3.200000e+01 : f32
    %24 = vector.broadcast %cst_10 : f32 to vector<16x1xf32>
    %25 = arith.divf %23, %24 : vector<16x1xf32>
    %26 = arith.mulf %20, %20 : vector<16x1xf32>
    %27 = arith.subf %25, %26 : vector<16x1xf32>
    %cst_11 = arith.constant 0.000000e+00 : f32
    %28 = vector.broadcast %cst_11 : f32 to vector<16x1xf32>
    %29 = arith.maximumf %27, %28 : vector<16x1xf32>
    %30 = vector.broadcast %20 : vector<16x1xf32> to vector<16x32xf32>
    %31 = arith.subf %16, %30 : vector<16x32xf32>
    %cst_12 = arith.constant 9.99999996E-13 : f32
    %32 = vector.broadcast %cst_12 : f32 to vector<16x1xf32>
    %33 = arith.addf %29, %32 : vector<16x1xf32>
    %34 = math.rsqrt %33 : vector<16x1xf32>
    %35 = vector.broadcast %34 : vector<16x1xf32> to vector<16x32xf32>
    %36 = arith.mulf %31, %35 : vector<16x32xf32>
    %37 = vector.broadcast %1 : vector<1x32xf32> to vector<16x32xf32>
    %38 = arith.mulf %36, %37 : vector<16x32xf32>
    %39 = vector.broadcast %2 : vector<1x32xf32> to vector<16x32xf32>
    %40 = arith.addf %38, %39 : vector<16x32xf32>
    %c0_13 = arith.constant 0 : index
    %c0_14 = arith.constant 0 : index
    %41 = vector.load %arg1[%c0_13, %c0_14] : memref<16x16xf32, #tpu.memory_space<vmem>>, vector<16x16xf32>
    %c0_15 = arith.constant 0 : index
    %c0_16 = arith.constant 0 : index
    %c0_17 = arith.constant 0 : index
    %42 = vector.load %arg9[%c0_15, %c0_16, %c0_17] : memref<2x8x128xf32, #tpu.memory_space<vmem>>, vector<1x8x128xf32>
    %43 = vector.shape_cast %42 : vector<1x8x128xf32> to vector<8x128xf32>
    %44 = vector.extract_strided_slice %43 {offsets = [0, 0], sizes = [1, 96], strides = [1, 1]} : vector<8x128xf32> to vector<1x96xf32>
    %45 = vector.extract_strided_slice %43 {offsets = [1, 0], sizes = [1, 32], strides = [1, 1]} : vector<8x128xf32> to vector<1x32xf32>
    %46 = vector.extract_strided_slice %43 {offsets = [2, 0], sizes = [1, 64], strides = [1, 1]} : vector<8x128xf32> to vector<1x64xf32>
    %47 = vector.extract_strided_slice %43 {offsets = [3, 0], sizes = [1, 32], strides = [1, 1]} : vector<8x128xf32> to vector<1x32xf32>
    %48 = vector.extract_strided_slice %43 {offsets = [4, 0], sizes = [1, 32], strides = [1, 1]} : vector<8x128xf32> to vector<1x32xf32>
    %49 = vector.extract_strided_slice %43 {offsets = [5, 0], sizes = [1, 32], strides = [1, 1]} : vector<8x128xf32> to vector<1x32xf32>
    %50 = vector.extract_strided_slice %43 {offsets = [6, 0], sizes = [1, 32], strides = [1, 1]} : vector<8x128xf32> to vector<1x32xf32>
    %51 = vector.extract_strided_slice %43 {offsets = [7, 0], sizes = [1, 32], strides = [1, 1]} : vector<8x128xf32> to vector<1x32xf32>
    %52 = arith.truncf %40 : vector<16x32xf32> to vector<16x32xbf16>
    %c0_18 = arith.constant 0 : index
    %c0_19 = arith.constant 0 : index
    %c0_20 = arith.constant 0 : index
    %53 = vector.load %arg5[%c0_18, %c0_19, %c0_20] : memref<2x32x96xbf16, #tpu.memory_space<vmem>>, vector<1x32x96xbf16>
    %54 = vector.shape_cast %53 : vector<1x32x96xbf16> to vector<32x96xbf16>
    %cst_21 = arith.constant dense<0.000000e+00> : vector<16x96xf32>
    %55 = tpu.matmul %52, %54, %cst_21 {dimension_numbers = #tpu.dot_dimension_numbers<[1], [0], [0], [1], [0, 0, 1, 1], [], []>} : vector<16x32xbf16>, vector<32x96xbf16>, vector<16x96xf32> -> vector<16x96xf32>
    %56 = vector.broadcast %44 : vector<1x96xf32> to vector<16x96xf32>
    %57 = arith.addf %55, %56 : vector<16x96xf32>
    %cst_22 = arith.constant 0.000000e+00 : f32
    %58 = vector.broadcast %cst_22 : f32 to vector<16x32xf32>
    %59 = vector.extract_strided_slice %57 {offsets = [0, 0], sizes = [16, 16], strides = [1, 1]} : vector<16x96xf32> to vector<16x16xf32>
    %60 = arith.truncf %59 : vector<16x16xf32> to vector<16x16xbf16>
    %61 = vector.extract_strided_slice %57 {offsets = [0, 32], sizes = [16, 16], strides = [1, 1]} : vector<16x96xf32> to vector<16x16xf32>
    %62 = arith.truncf %61 : vector<16x16xf32> to vector<16x16xbf16>
    %63 = vector.extract_strided_slice %57 {offsets = [0, 64], sizes = [16, 16], strides = [1, 1]} : vector<16x96xf32> to vector<16x16xf32>
    %64 = arith.truncf %63 : vector<16x16xf32> to vector<16x16xbf16>
    %cst_23 = arith.constant dense<0.000000e+00> : vector<16x16xf32>
    %65 = tpu.matmul %60, %62, %cst_23 {dimension_numbers = #tpu.dot_dimension_numbers<[1], [1], [0], [0], [0, 0, 1, 0], [], []>} : vector<16x16xbf16>, vector<16x16xbf16>, vector<16x16xf32> -> vector<16x16xf32>
    %cst_24 = arith.constant 2.500000e-01 : f32
    %66 = vector.broadcast %cst_24 : f32 to vector<16x16xf32>
    %67 = arith.mulf %65, %66 : vector<16x16xf32>
    %68 = arith.addf %67, %41 : vector<16x16xf32>
    %cst_25 = arith.constant dense<0xFF800000> : vector<16xf32>
    %69 = vector.multi_reduction <maximumf>, %68, %cst_25 [1] : vector<16x16xf32> to vector<16xf32>
    %70 = vector.shape_cast %69 : vector<16xf32> to vector<16x1xf32>
    %71 = vector.broadcast %70 : vector<16x1xf32> to vector<16x16xf32>
    %72 = arith.subf %68, %71 : vector<16x16xf32>
    %73 = math.exp %72 : vector<16x16xf32>
    %cst_26 = arith.constant dense<0.000000e+00> : vector<16xf32>
    %74 = vector.multi_reduction <add>, %73, %cst_26 [1] : vector<16x16xf32> to vector<16xf32>
    %75 = vector.shape_cast %74 : vector<16xf32> to vector<16x1xf32>
    %76 = tpu.reciprocal %75 {approx = true} : vector<16x1xf32> -> vector<16x1xf32>
    %77 = vector.broadcast %76 : vector<16x1xf32> to vector<16x16xf32>
    %78 = arith.mulf %73, %77 : vector<16x16xf32>
    %79 = arith.truncf %78 : vector<16x16xf32> to vector<16x16xbf16>
    %cst_27 = arith.constant dense<0.000000e+00> : vector<16x16xf32>
    %80 = tpu.matmul %79, %64, %cst_27 {dimension_numbers = #tpu.dot_dimension_numbers<[1], [0], [0], [1], [0, 0, 1, 1], [], []>} : vector<16x16xbf16>, vector<16x16xbf16>, vector<16x16xf32> -> vector<16x16xf32>
    %81 = arith.truncf %80 : vector<16x16xf32> to vector<16x16xbf16>
    %c0_28 = arith.constant 0 : index
    %c0_29 = arith.constant 0 : index
    %c0_30 = arith.constant 0 : index
    %82 = vector.load %arg6[%c0_28, %c0_29, %c0_30] : memref<2x32x32xbf16, #tpu.memory_space<vmem>>, vector<1x16x32xbf16>
    %83 = vector.shape_cast %82 : vector<1x16x32xbf16> to vector<16x32xbf16>
    %cst_31 = arith.constant dense<0.000000e+00> : vector<16x32xf32>
    %84 = tpu.matmul %81, %83, %cst_31 {dimension_numbers = #tpu.dot_dimension_numbers<[1], [0], [0], [1], [0, 0, 1, 1], [], []>} : vector<16x16xbf16>, vector<16x32xbf16>, vector<16x32xf32> -> vector<16x32xf32>
    %85 = arith.addf %58, %84 : vector<16x32xf32>
    %86 = vector.extract_strided_slice %57 {offsets = [0, 16], sizes = [16, 16], strides = [1, 1]} : vector<16x96xf32> to vector<16x16xf32>
    %87 = arith.truncf %86 : vector<16x16xf32> to vector<16x16xbf16>
    %88 = vector.extract_strided_slice %57 {offsets = [0, 48], sizes = [16, 16], strides = [1, 1]} : vector<16x96xf32> to vector<16x16xf32>
    %89 = arith.truncf %88 : vector<16x16xf32> to vector<16x16xbf16>
    %90 = vector.extract_strided_slice %57 {offsets = [0, 80], sizes = [16, 16], strides = [1, 1]} : vector<16x96xf32> to vector<16x16xf32>
    %91 = arith.truncf %90 : vector<16x16xf32> to vector<16x16xbf16>
    %cst_32 = arith.constant dense<0.000000e+00> : vector<16x16xf32>
    %92 = tpu.matmul %87, %89, %cst_32 {dimension_numbers = #tpu.dot_dimension_numbers<[1], [1], [0], [0], [0, 0, 1, 0], [], []>} : vector<16x16xbf16>, vector<16x16xbf16>, vector<16x16xf32> -> vector<16x16xf32>
    %cst_33 = arith.constant 2.500000e-01 : f32
    %93 = vector.broadcast %cst_33 : f32 to vector<16x16xf32>
    %94 = arith.mulf %92, %93 : vector<16x16xf32>
    %95 = arith.addf %94, %41 : vector<16x16xf32>
    %cst_34 = arith.constant dense<0xFF800000> : vector<16xf32>
    %96 = vector.multi_reduction <maximumf>, %95, %cst_34 [1] : vector<16x16xf32> to vector<16xf32>
    %97 = vector.shape_cast %96 : vector<16xf32> to vector<16x1xf32>
    %98 = vector.broadcast %97 : vector<16x1xf32> to vector<16x16xf32>
    %99 = arith.subf %95, %98 : vector<16x16xf32>
    %100 = math.exp %99 : vector<16x16xf32>
    %cst_35 = arith.constant dense<0.000000e+00> : vector<16xf32>
    %101 = vector.multi_reduction <add>, %100, %cst_35 [1] : vector<16x16xf32> to vector<16xf32>
    %102 = vector.shape_cast %101 : vector<16xf32> to vector<16x1xf32>
    %103 = tpu.reciprocal %102 {approx = true} : vector<16x1xf32> -> vector<16x1xf32>
    %104 = vector.broadcast %103 : vector<16x1xf32> to vector<16x16xf32>
    %105 = arith.mulf %100, %104 : vector<16x16xf32>
    %106 = arith.truncf %105 : vector<16x16xf32> to vector<16x16xbf16>
    %cst_36 = arith.constant dense<0.000000e+00> : vector<16x16xf32>
    %107 = tpu.matmul %106, %91, %cst_36 {dimension_numbers = #tpu.dot_dimension_numbers<[1], [0], [0], [1], [0, 0, 1, 1], [], []>} : vector<16x16xbf16>, vector<16x16xbf16>, vector<16x16xf32> -> vector<16x16xf32>
    %108 = arith.truncf %107 : vector<16x16xf32> to vector<16x16xbf16>
    %c0_37 = arith.constant 0 : index
    %c16 = arith.constant 16 : index
    %c0_38 = arith.constant 0 : index
    %109 = vector.load %arg6[%c0_37, %c16, %c0_38] : memref<2x32x32xbf16, #tpu.memory_space<vmem>>, vector<1x16x32xbf16>
    %110 = vector.shape_cast %109 : vector<1x16x32xbf16> to vector<16x32xbf16>
    %cst_39 = arith.constant dense<0.000000e+00> : vector<16x32xf32>
    %111 = tpu.matmul %108, %110, %cst_39 {dimension_numbers = #tpu.dot_dimension_numbers<[1], [0], [0], [1], [0, 0, 1, 1], [], []>} : vector<16x16xbf16>, vector<16x32xbf16>, vector<16x32xf32> -> vector<16x32xf32>
    %112 = arith.addf %85, %111 : vector<16x32xf32>
    %113 = arith.addf %40, %112 : vector<16x32xf32>
    %114 = vector.broadcast %45 : vector<1x32xf32> to vector<16x32xf32>
    %115 = arith.addf %113, %114 : vector<16x32xf32>
    %cst_40 = arith.constant dense<0.000000e+00> : vector<16xf32>
    %116 = vector.multi_reduction <add>, %115, %cst_40 [1] : vector<16x32xf32> to vector<16xf32>
    %117 = vector.shape_cast %116 : vector<16xf32> to vector<16x1xf32>
    %cst_41 = arith.constant 3.200000e+01 : f32
    %118 = vector.broadcast %cst_41 : f32 to vector<16x1xf32>
    %119 = arith.divf %117, %118 : vector<16x1xf32>
    %120 = arith.mulf %115, %115 : vector<16x32xf32>
    %cst_42 = arith.constant dense<0.000000e+00> : vector<16xf32>
    %121 = vector.multi_reduction <add>, %120, %cst_42 [1] : vector<16x32xf32> to vector<16xf32>
    %122 = vector.shape_cast %121 : vector<16xf32> to vector<16x1xf32>
    %cst_43 = arith.constant 3.200000e+01 : f32
    %123 = vector.broadcast %cst_43 : f32 to vector<16x1xf32>
    %124 = arith.divf %122, %123 : vector<16x1xf32>
    %125 = arith.mulf %119, %119 : vector<16x1xf32>
    %126 = arith.subf %124, %125 : vector<16x1xf32>
    %cst_44 = arith.constant 0.000000e+00 : f32
    %127 = vector.broadcast %cst_44 : f32 to vector<16x1xf32>
    %128 = arith.maximumf %126, %127 : vector<16x1xf32>
    %129 = vector.broadcast %119 : vector<16x1xf32> to vector<16x32xf32>
    %130 = arith.subf %115, %129 : vector<16x32xf32>
    %cst_45 = arith.constant 9.99999996E-13 : f32
    %131 = vector.broadcast %cst_45 : f32 to vector<16x1xf32>
    %132 = arith.addf %128, %131 : vector<16x1xf32>
    %133 = math.rsqrt %132 : vector<16x1xf32>
    %134 = vector.broadcast %133 : vector<16x1xf32> to vector<16x32xf32>
    %135 = arith.mulf %130, %134 : vector<16x32xf32>
    %136 = vector.broadcast %48 : vector<1x32xf32> to vector<16x32xf32>
    %137 = arith.mulf %135, %136 : vector<16x32xf32>
    %138 = vector.broadcast %49 : vector<1x32xf32> to vector<16x32xf32>
    %139 = arith.addf %137, %138 : vector<16x32xf32>
    %140 = arith.truncf %139 : vector<16x32xf32> to vector<16x32xbf16>
    %c0_46 = arith.constant 0 : index
    %c0_47 = arith.constant 0 : index
    %c0_48 = arith.constant 0 : index
    %141 = vector.load %arg7[%c0_46, %c0_47, %c0_48] : memref<2x32x64xbf16, #tpu.memory_space<vmem>>, vector<1x32x64xbf16>
    %142 = vector.shape_cast %141 : vector<1x32x64xbf16> to vector<32x64xbf16>
    %cst_49 = arith.constant dense<0.000000e+00> : vector<16x64xf32>
    %143 = tpu.matmul %140, %142, %cst_49 {dimension_numbers = #tpu.dot_dimension_numbers<[1], [0], [0], [1], [0, 0, 1, 1], [], []>} : vector<16x32xbf16>, vector<32x64xbf16>, vector<16x64xf32> -> vector<16x64xf32>
    %144 = vector.broadcast %46 : vector<1x64xf32> to vector<16x64xf32>
    %145 = arith.addf %143, %144 : vector<16x64xf32>
    %146 = arith.mulf %145, %145 : vector<16x64xf32>
    %147 = arith.mulf %145, %146 : vector<16x64xf32>
    %cst_50 = arith.constant 4.471500e-02 : f32
    %148 = vector.broadcast %cst_50 : f32 to vector<16x64xf32>
    %149 = arith.mulf %148, %147 : vector<16x64xf32>
    %150 = arith.addf %145, %149 : vector<16x64xf32>
    %cst_51 = arith.constant 0.797884583 : f32
    %151 = vector.broadcast %cst_51 : f32 to vector<16x64xf32>
    %152 = arith.mulf %151, %150 : vector<16x64xf32>
    %153 = math.tanh %152 : vector<16x64xf32>
    %cst_52 = arith.constant 1.000000e+00 : f32
    %154 = vector.broadcast %cst_52 : f32 to vector<16x64xf32>
    %155 = arith.addf %154, %153 : vector<16x64xf32>
    %cst_53 = arith.constant 5.000000e-01 : f32
    %156 = vector.broadcast %cst_53 : f32 to vector<16x64xf32>
    %157 = arith.mulf %156, %155 : vector<16x64xf32>
    %158 = arith.mulf %145, %157 : vector<16x64xf32>
    %159 = arith.truncf %158 : vector<16x64xf32> to vector<16x64xbf16>
    %c0_54 = arith.constant 0 : index
    %c0_55 = arith.constant 0 : index
    %c0_56 = arith.constant 0 : index
    %160 = vector.load %arg8[%c0_54, %c0_55, %c0_56] : memref<2x64x32xbf16, #tpu.memory_space<vmem>>, vector<1x64x32xbf16>
    %161 = vector.shape_cast %160 : vector<1x64x32xbf16> to vector<64x32xbf16>
    %cst_57 = arith.constant dense<0.000000e+00> : vector<16x32xf32>
    %162 = tpu.matmul %159, %161, %cst_57 {dimension_numbers = #tpu.dot_dimension_numbers<[1], [0], [0], [1], [0, 0, 1, 1], [], []>} : vector<16x64xbf16>, vector<64x32xbf16>, vector<16x32xf32> -> vector<16x32xf32>
    %163 = vector.broadcast %47 : vector<1x32xf32> to vector<16x32xf32>
    %164 = arith.addf %162, %163 : vector<16x32xf32>
    %165 = arith.addf %139, %164 : vector<16x32xf32>
    %cst_58 = arith.constant dense<0.000000e+00> : vector<16xf32>
    %166 = vector.multi_reduction <add>, %165, %cst_58 [1] : vector<16x32xf32> to vector<16xf32>
    %167 = vector.shape_cast %166 : vector<16xf32> to vector<16x1xf32>
    %cst_59 = arith.constant 3.200000e+01 : f32
    %168 = vector.broadcast %cst_59 : f32 to vector<16x1xf32>
    %169 = arith.divf %167, %168 : vector<16x1xf32>
    %170 = arith.mulf %165, %165 : vector<16x32xf32>
    %cst_60 = arith.constant dense<0.000000e+00> : vector<16xf32>
    %171 = vector.multi_reduction <add>, %170, %cst_60 [1] : vector<16x32xf32> to vector<16xf32>
    %172 = vector.shape_cast %171 : vector<16xf32> to vector<16x1xf32>
    %cst_61 = arith.constant 3.200000e+01 : f32
    %173 = vector.broadcast %cst_61 : f32 to vector<16x1xf32>
    %174 = arith.divf %172, %173 : vector<16x1xf32>
    %175 = arith.mulf %169, %169 : vector<16x1xf32>
    %176 = arith.subf %174, %175 : vector<16x1xf32>
    %cst_62 = arith.constant 0.000000e+00 : f32
    %177 = vector.broadcast %cst_62 : f32 to vector<16x1xf32>
    %178 = arith.maximumf %176, %177 : vector<16x1xf32>
    %179 = vector.broadcast %169 : vector<16x1xf32> to vector<16x32xf32>
    %180 = arith.subf %165, %179 : vector<16x32xf32>
    %cst_63 = arith.constant 9.99999996E-13 : f32
    %181 = vector.broadcast %cst_63 : f32 to vector<16x1xf32>
    %182 = arith.addf %178, %181 : vector<16x1xf32>
    %183 = math.rsqrt %182 : vector<16x1xf32>
    %184 = vector.broadcast %183 : vector<16x1xf32> to vector<16x32xf32>
    %185 = arith.mulf %180, %184 : vector<16x32xf32>
    %186 = vector.broadcast %50 : vector<1x32xf32> to vector<16x32xf32>
    %187 = arith.mulf %185, %186 : vector<16x32xf32>
    %188 = vector.broadcast %51 : vector<1x32xf32> to vector<16x32xf32>
    %189 = arith.addf %187, %188 : vector<16x32xf32>
    %c1 = arith.constant 1 : index
    %c0_64 = arith.constant 0 : index
    %c0_65 = arith.constant 0 : index
    %190 = vector.load %arg9[%c1, %c0_64, %c0_65] : memref<2x8x128xf32, #tpu.memory_space<vmem>>, vector<1x8x128xf32>
    %191 = vector.shape_cast %190 : vector<1x8x128xf32> to vector<8x128xf32>
    %192 = vector.extract_strided_slice %191 {offsets = [0, 0], sizes = [1, 96], strides = [1, 1]} : vector<8x128xf32> to vector<1x96xf32>
    %193 = vector.extract_strided_slice %191 {offsets = [1, 0], sizes = [1, 32], strides = [1, 1]} : vector<8x128xf32> to vector<1x32xf32>
    %194 = vector.extract_strided_slice %191 {offsets = [2, 0], sizes = [1, 64], strides = [1, 1]} : vector<8x128xf32> to vector<1x64xf32>
    %195 = vector.extract_strided_slice %191 {offsets = [3, 0], sizes = [1, 32], strides = [1, 1]} : vector<8x128xf32> to vector<1x32xf32>
    %196 = vector.extract_strided_slice %191 {offsets = [4, 0], sizes = [1, 32], strides = [1, 1]} : vector<8x128xf32> to vector<1x32xf32>
    %197 = vector.extract_strided_slice %191 {offsets = [5, 0], sizes = [1, 32], strides = [1, 1]} : vector<8x128xf32> to vector<1x32xf32>
    %198 = vector.extract_strided_slice %191 {offsets = [6, 0], sizes = [1, 32], strides = [1, 1]} : vector<8x128xf32> to vector<1x32xf32>
    %199 = vector.extract_strided_slice %191 {offsets = [7, 0], sizes = [1, 32], strides = [1, 1]} : vector<8x128xf32> to vector<1x32xf32>
    %200 = arith.truncf %189 : vector<16x32xf32> to vector<16x32xbf16>
    %c1_66 = arith.constant 1 : index
    %c0_67 = arith.constant 0 : index
    %c0_68 = arith.constant 0 : index
    %201 = vector.load %arg5[%c1_66, %c0_67, %c0_68] : memref<2x32x96xbf16, #tpu.memory_space<vmem>>, vector<1x32x96xbf16>
    %202 = vector.shape_cast %201 : vector<1x32x96xbf16> to vector<32x96xbf16>
    %cst_69 = arith.constant dense<0.000000e+00> : vector<16x96xf32>
    %203 = tpu.matmul %200, %202, %cst_69 {dimension_numbers = #tpu.dot_dimension_numbers<[1], [0], [0], [1], [0, 0, 1, 1], [], []>} : vector<16x32xbf16>, vector<32x96xbf16>, vector<16x96xf32> -> vector<16x96xf32>
    %204 = vector.broadcast %192 : vector<1x96xf32> to vector<16x96xf32>
    %205 = arith.addf %203, %204 : vector<16x96xf32>
    %cst_70 = arith.constant 0.000000e+00 : f32
    %206 = vector.broadcast %cst_70 : f32 to vector<16x32xf32>
    %207 = vector.extract_strided_slice %205 {offsets = [0, 0], sizes = [16, 16], strides = [1, 1]} : vector<16x96xf32> to vector<16x16xf32>
    %208 = arith.truncf %207 : vector<16x16xf32> to vector<16x16xbf16>
    %209 = vector.extract_strided_slice %205 {offsets = [0, 32], sizes = [16, 16], strides = [1, 1]} : vector<16x96xf32> to vector<16x16xf32>
    %210 = arith.truncf %209 : vector<16x16xf32> to vector<16x16xbf16>
    %211 = vector.extract_strided_slice %205 {offsets = [0, 64], sizes = [16, 16], strides = [1, 1]} : vector<16x96xf32> to vector<16x16xf32>
    %212 = arith.truncf %211 : vector<16x16xf32> to vector<16x16xbf16>
    %cst_71 = arith.constant dense<0.000000e+00> : vector<16x16xf32>
    %213 = tpu.matmul %208, %210, %cst_71 {dimension_numbers = #tpu.dot_dimension_numbers<[1], [1], [0], [0], [0, 0, 1, 0], [], []>} : vector<16x16xbf16>, vector<16x16xbf16>, vector<16x16xf32> -> vector<16x16xf32>
    %cst_72 = arith.constant 2.500000e-01 : f32
    %214 = vector.broadcast %cst_72 : f32 to vector<16x16xf32>
    %215 = arith.mulf %213, %214 : vector<16x16xf32>
    %216 = arith.addf %215, %41 : vector<16x16xf32>
    %cst_73 = arith.constant dense<0xFF800000> : vector<16xf32>
    %217 = vector.multi_reduction <maximumf>, %216, %cst_73 [1] : vector<16x16xf32> to vector<16xf32>
    %218 = vector.shape_cast %217 : vector<16xf32> to vector<16x1xf32>
    %219 = vector.broadcast %218 : vector<16x1xf32> to vector<16x16xf32>
    %220 = arith.subf %216, %219 : vector<16x16xf32>
    %221 = math.exp %220 : vector<16x16xf32>
    %cst_74 = arith.constant dense<0.000000e+00> : vector<16xf32>
    %222 = vector.multi_reduction <add>, %221, %cst_74 [1] : vector<16x16xf32> to vector<16xf32>
    %223 = vector.shape_cast %222 : vector<16xf32> to vector<16x1xf32>
    %224 = tpu.reciprocal %223 {approx = true} : vector<16x1xf32> -> vector<16x1xf32>
    %225 = vector.broadcast %224 : vector<16x1xf32> to vector<16x16xf32>
    %226 = arith.mulf %221, %225 : vector<16x16xf32>
    %227 = arith.truncf %226 : vector<16x16xf32> to vector<16x16xbf16>
    %cst_75 = arith.constant dense<0.000000e+00> : vector<16x16xf32>
    %228 = tpu.matmul %227, %212, %cst_75 {dimension_numbers = #tpu.dot_dimension_numbers<[1], [0], [0], [1], [0, 0, 1, 1], [], []>} : vector<16x16xbf16>, vector<16x16xbf16>, vector<16x16xf32> -> vector<16x16xf32>
    %229 = arith.truncf %228 : vector<16x16xf32> to vector<16x16xbf16>
    %c1_76 = arith.constant 1 : index
    %c0_77 = arith.constant 0 : index
    %c0_78 = arith.constant 0 : index
    %230 = vector.load %arg6[%c1_76, %c0_77, %c0_78] : memref<2x32x32xbf16, #tpu.memory_space<vmem>>, vector<1x16x32xbf16>
    %231 = vector.shape_cast %230 : vector<1x16x32xbf16> to vector<16x32xbf16>
    %cst_79 = arith.constant dense<0.000000e+00> : vector<16x32xf32>
    %232 = tpu.matmul %229, %231, %cst_79 {dimension_numbers = #tpu.dot_dimension_numbers<[1], [0], [0], [1], [0, 0, 1, 1], [], []>} : vector<16x16xbf16>, vector<16x32xbf16>, vector<16x32xf32> -> vector<16x32xf32>
    %233 = arith.addf %206, %232 : vector<16x32xf32>
    %234 = vector.extract_strided_slice %205 {offsets = [0, 16], sizes = [16, 16], strides = [1, 1]} : vector<16x96xf32> to vector<16x16xf32>
    %235 = arith.truncf %234 : vector<16x16xf32> to vector<16x16xbf16>
    %236 = vector.extract_strided_slice %205 {offsets = [0, 48], sizes = [16, 16], strides = [1, 1]} : vector<16x96xf32> to vector<16x16xf32>
    %237 = arith.truncf %236 : vector<16x16xf32> to vector<16x16xbf16>
    %238 = vector.extract_strided_slice %205 {offsets = [0, 80], sizes = [16, 16], strides = [1, 1]} : vector<16x96xf32> to vector<16x16xf32>
    %239 = arith.truncf %238 : vector<16x16xf32> to vector<16x16xbf16>
    %cst_80 = arith.constant dense<0.000000e+00> : vector<16x16xf32>
    %240 = tpu.matmul %235, %237, %cst_80 {dimension_numbers = #tpu.dot_dimension_numbers<[1], [1], [0], [0], [0, 0, 1, 0], [], []>} : vector<16x16xbf16>, vector<16x16xbf16>, vector<16x16xf32> -> vector<16x16xf32>
    %cst_81 = arith.constant 2.500000e-01 : f32
    %241 = vector.broadcast %cst_81 : f32 to vector<16x16xf32>
    %242 = arith.mulf %240, %241 : vector<16x16xf32>
    %243 = arith.addf %242, %41 : vector<16x16xf32>
    %cst_82 = arith.constant dense<0xFF800000> : vector<16xf32>
    %244 = vector.multi_reduction <maximumf>, %243, %cst_82 [1] : vector<16x16xf32> to vector<16xf32>
    %245 = vector.shape_cast %244 : vector<16xf32> to vector<16x1xf32>
    %246 = vector.broadcast %245 : vector<16x1xf32> to vector<16x16xf32>
    %247 = arith.subf %243, %246 : vector<16x16xf32>
    %248 = math.exp %247 : vector<16x16xf32>
    %cst_83 = arith.constant dense<0.000000e+00> : vector<16xf32>
    %249 = vector.multi_reduction <add>, %248, %cst_83 [1] : vector<16x16xf32> to vector<16xf32>
    %250 = vector.shape_cast %249 : vector<16xf32> to vector<16x1xf32>
    %251 = tpu.reciprocal %250 {approx = true} : vector<16x1xf32> -> vector<16x1xf32>
    %252 = vector.broadcast %251 : vector<16x1xf32> to vector<16x16xf32>
    %253 = arith.mulf %248, %252 : vector<16x16xf32>
    %254 = arith.truncf %253 : vector<16x16xf32> to vector<16x16xbf16>
    %cst_84 = arith.constant dense<0.000000e+00> : vector<16x16xf32>
    %255 = tpu.matmul %254, %239, %cst_84 {dimension_numbers = #tpu.dot_dimension_numbers<[1], [0], [0], [1], [0, 0, 1, 1], [], []>} : vector<16x16xbf16>, vector<16x16xbf16>, vector<16x16xf32> -> vector<16x16xf32>
    %256 = arith.truncf %255 : vector<16x16xf32> to vector<16x16xbf16>
    %c1_85 = arith.constant 1 : index
    %c16_86 = arith.constant 16 : index
    %c0_87 = arith.constant 0 : index
    %257 = vector.load %arg6[%c1_85, %c16_86, %c0_87] : memref<2x32x32xbf16, #tpu.memory_space<vmem>>, vector<1x16x32xbf16>
    %258 = vector.shape_cast %257 : vector<1x16x32xbf16> to vector<16x32xbf16>
    %cst_88 = arith.constant dense<0.000000e+00> : vector<16x32xf32>
    %259 = tpu.matmul %256, %258, %cst_88 {dimension_numbers = #tpu.dot_dimension_numbers<[1], [0], [0], [1], [0, 0, 1, 1], [], []>} : vector<16x16xbf16>, vector<16x32xbf16>, vector<16x32xf32> -> vector<16x32xf32>
    %260 = arith.addf %233, %259 : vector<16x32xf32>
    %261 = arith.addf %189, %260 : vector<16x32xf32>
    %262 = vector.broadcast %193 : vector<1x32xf32> to vector<16x32xf32>
    %263 = arith.addf %261, %262 : vector<16x32xf32>
    %cst_89 = arith.constant dense<0.000000e+00> : vector<16xf32>
    %264 = vector.multi_reduction <add>, %263, %cst_89 [1] : vector<16x32xf32> to vector<16xf32>
    %265 = vector.shape_cast %264 : vector<16xf32> to vector<16x1xf32>
    %cst_90 = arith.constant 3.200000e+01 : f32
    %266 = vector.broadcast %cst_90 : f32 to vector<16x1xf32>
    %267 = arith.divf %265, %266 : vector<16x1xf32>
    %268 = arith.mulf %263, %263 : vector<16x32xf32>
    %cst_91 = arith.constant dense<0.000000e+00> : vector<16xf32>
    %269 = vector.multi_reduction <add>, %268, %cst_91 [1] : vector<16x32xf32> to vector<16xf32>
    %270 = vector.shape_cast %269 : vector<16xf32> to vector<16x1xf32>
    %cst_92 = arith.constant 3.200000e+01 : f32
    %271 = vector.broadcast %cst_92 : f32 to vector<16x1xf32>
    %272 = arith.divf %270, %271 : vector<16x1xf32>
    %273 = arith.mulf %267, %267 : vector<16x1xf32>
    %274 = arith.subf %272, %273 : vector<16x1xf32>
    %cst_93 = arith.constant 0.000000e+00 : f32
    %275 = vector.broadcast %cst_93 : f32 to vector<16x1xf32>
    %276 = arith.maximumf %274, %275 : vector<16x1xf32>
    %277 = vector.broadcast %267 : vector<16x1xf32> to vector<16x32xf32>
    %278 = arith.subf %263, %277 : vector<16x32xf32>
    %cst_94 = arith.constant 9.99999996E-13 : f32
    %279 = vector.broadcast %cst_94 : f32 to vector<16x1xf32>
    %280 = arith.addf %276, %279 : vector<16x1xf32>
    %281 = math.rsqrt %280 : vector<16x1xf32>
    %282 = vector.broadcast %281 : vector<16x1xf32> to vector<16x32xf32>
    %283 = arith.mulf %278, %282 : vector<16x32xf32>
    %284 = vector.broadcast %196 : vector<1x32xf32> to vector<16x32xf32>
    %285 = arith.mulf %283, %284 : vector<16x32xf32>
    %286 = vector.broadcast %197 : vector<1x32xf32> to vector<16x32xf32>
    %287 = arith.addf %285, %286 : vector<16x32xf32>
    %288 = arith.truncf %287 : vector<16x32xf32> to vector<16x32xbf16>
    %c1_95 = arith.constant 1 : index
    %c0_96 = arith.constant 0 : index
    %c0_97 = arith.constant 0 : index
    %289 = vector.load %arg7[%c1_95, %c0_96, %c0_97] : memref<2x32x64xbf16, #tpu.memory_space<vmem>>, vector<1x32x64xbf16>
    %290 = vector.shape_cast %289 : vector<1x32x64xbf16> to vector<32x64xbf16>
    %cst_98 = arith.constant dense<0.000000e+00> : vector<16x64xf32>
    %291 = tpu.matmul %288, %290, %cst_98 {dimension_numbers = #tpu.dot_dimension_numbers<[1], [0], [0], [1], [0, 0, 1, 1], [], []>} : vector<16x32xbf16>, vector<32x64xbf16>, vector<16x64xf32> -> vector<16x64xf32>
    %292 = vector.broadcast %194 : vector<1x64xf32> to vector<16x64xf32>
    %293 = arith.addf %291, %292 : vector<16x64xf32>
    %294 = arith.mulf %293, %293 : vector<16x64xf32>
    %295 = arith.mulf %293, %294 : vector<16x64xf32>
    %cst_99 = arith.constant 4.471500e-02 : f32
    %296 = vector.broadcast %cst_99 : f32 to vector<16x64xf32>
    %297 = arith.mulf %296, %295 : vector<16x64xf32>
    %298 = arith.addf %293, %297 : vector<16x64xf32>
    %cst_100 = arith.constant 0.797884583 : f32
    %299 = vector.broadcast %cst_100 : f32 to vector<16x64xf32>
    %300 = arith.mulf %299, %298 : vector<16x64xf32>
    %301 = math.tanh %300 : vector<16x64xf32>
    %cst_101 = arith.constant 1.000000e+00 : f32
    %302 = vector.broadcast %cst_101 : f32 to vector<16x64xf32>
    %303 = arith.addf %302, %301 : vector<16x64xf32>
    %cst_102 = arith.constant 5.000000e-01 : f32
    %304 = vector.broadcast %cst_102 : f32 to vector<16x64xf32>
    %305 = arith.mulf %304, %303 : vector<16x64xf32>
    %306 = arith.mulf %293, %305 : vector<16x64xf32>
    %307 = arith.truncf %306 : vector<16x64xf32> to vector<16x64xbf16>
    %c1_103 = arith.constant 1 : index
    %c0_104 = arith.constant 0 : index
    %c0_105 = arith.constant 0 : index
    %308 = vector.load %arg8[%c1_103, %c0_104, %c0_105] : memref<2x64x32xbf16, #tpu.memory_space<vmem>>, vector<1x64x32xbf16>
    %309 = vector.shape_cast %308 : vector<1x64x32xbf16> to vector<64x32xbf16>
    %cst_106 = arith.constant dense<0.000000e+00> : vector<16x32xf32>
    %310 = tpu.matmul %307, %309, %cst_106 {dimension_numbers = #tpu.dot_dimension_numbers<[1], [0], [0], [1], [0, 0, 1, 1], [], []>} : vector<16x64xbf16>, vector<64x32xbf16>, vector<16x32xf32> -> vector<16x32xf32>
    %311 = vector.broadcast %195 : vector<1x32xf32> to vector<16x32xf32>
    %312 = arith.addf %310, %311 : vector<16x32xf32>
    %313 = arith.addf %287, %312 : vector<16x32xf32>
    %cst_107 = arith.constant dense<0.000000e+00> : vector<16xf32>
    %314 = vector.multi_reduction <add>, %313, %cst_107 [1] : vector<16x32xf32> to vector<16xf32>
    %315 = vector.shape_cast %314 : vector<16xf32> to vector<16x1xf32>
    %cst_108 = arith.constant 3.200000e+01 : f32
    %316 = vector.broadcast %cst_108 : f32 to vector<16x1xf32>
    %317 = arith.divf %315, %316 : vector<16x1xf32>
    %318 = arith.mulf %313, %313 : vector<16x32xf32>
    %cst_109 = arith.constant dense<0.000000e+00> : vector<16xf32>
    %319 = vector.multi_reduction <add>, %318, %cst_109 [1] : vector<16x32xf32> to vector<16xf32>
    %320 = vector.shape_cast %319 : vector<16xf32> to vector<16x1xf32>
    %cst_110 = arith.constant 3.200000e+01 : f32
    %321 = vector.broadcast %cst_110 : f32 to vector<16x1xf32>
    %322 = arith.divf %320, %321 : vector<16x1xf32>
    %323 = arith.mulf %317, %317 : vector<16x1xf32>
    %324 = arith.subf %322, %323 : vector<16x1xf32>
    %cst_111 = arith.constant 0.000000e+00 : f32
    %325 = vector.broadcast %cst_111 : f32 to vector<16x1xf32>
    %326 = arith.maximumf %324, %325 : vector<16x1xf32>
    %327 = vector.broadcast %317 : vector<16x1xf32> to vector<16x32xf32>
    %328 = arith.subf %313, %327 : vector<16x32xf32>
    %cst_112 = arith.constant 9.99999996E-13 : f32
    %329 = vector.broadcast %cst_112 : f32 to vector<16x1xf32>
    %330 = arith.addf %326, %329 : vector<16x1xf32>
    %331 = math.rsqrt %330 : vector<16x1xf32>
    %332 = vector.broadcast %331 : vector<16x1xf32> to vector<16x32xf32>
    %333 = arith.mulf %328, %332 : vector<16x32xf32>
    %334 = vector.broadcast %198 : vector<1x32xf32> to vector<16x32xf32>
    %335 = arith.mulf %333, %334 : vector<16x32xf32>
    %336 = vector.broadcast %199 : vector<1x32xf32> to vector<16x32xf32>
    %337 = arith.addf %335, %336 : vector<16x32xf32>
    %338 = tpu.iota {dimensions = array<i32: 0>} : vector<2x16xi32>
    %339 = tpu.iota {dimensions = array<i32: 1>} : vector<2x16xi32>
    %c8_i32 = arith.constant 8 : i32
    %340 = vector.broadcast %c8_i32 : i32 to vector<2x16xi32>
    %341 = arith.muli %338, %340 : vector<2x16xi32>
    %342 = arith.cmpi eq, %339, %341 : vector<2x16xi32>
    %343 = arith.extui %342 : vector<2x16xi1> to vector<2x16xi32>
    %344 = arith.sitofp %343 : vector<2x16xi32> to vector<2x16xf32>
    %345 = arith.truncf %344 : vector<2x16xf32> to vector<2x16xbf16>
    %346 = arith.truncf %337 : vector<16x32xf32> to vector<16x32xbf16>
    %cst_113 = arith.constant dense<0.000000e+00> : vector<2x32xf32>
    %347 = tpu.matmul %345, %346, %cst_113 {dimension_numbers = #tpu.dot_dimension_numbers<[1], [0], [0], [1], [0, 0, 1, 1], [], []>} : vector<2x16xbf16>, vector<16x32xbf16>, vector<2x32xf32> -> vector<2x32xf32>
    %348 = arith.truncf %347 : vector<2x32xf32> to vector<2x32xbf16>
    %c0_114 = arith.constant 0 : index
    %c0_115 = arith.constant 0 : index
    %349 = vector.load %arg11[%c0_114, %c0_115] : memref<128x32xbf16, #tpu.memory_space<vmem>>, vector<32x32xbf16>
    %cst_116 = arith.constant dense<0.000000e+00> : vector<2x32xf32>
    %350 = tpu.matmul %348, %349, %cst_116 {dimension_numbers = #tpu.dot_dimension_numbers<[1], [0], [0], [1], [0, 0, 1, 1], [], []>} : vector<2x32xbf16>, vector<32x32xbf16>, vector<2x32xf32> -> vector<2x32xf32>
    %351 = vector.broadcast %3 : vector<1x32xf32> to vector<2x32xf32>
    %352 = arith.addf %350, %351 : vector<2x32xf32>
    %353 = math.tanh %352 : vector<2x32xf32>
    %354 = arith.truncf %353 : vector<2x32xf32> to vector<2x32xbf16>
    %c32 = arith.constant 32 : index
    %c0_117 = arith.constant 0 : index
    %355 = vector.load %arg11[%c32, %c0_117] : memref<128x32xbf16, #tpu.memory_space<vmem>>, vector<32x32xbf16>
    %cst_118 = arith.constant dense<0.000000e+00> : vector<2x32xf32>
    %356 = tpu.matmul %354, %355, %cst_118 {dimension_numbers = #tpu.dot_dimension_numbers<[1], [0], [0], [1], [0, 0, 1, 1], [], []>} : vector<2x32xbf16>, vector<32x32xbf16>, vector<2x32xf32> -> vector<2x32xf32>
    %c0_119 = arith.constant 0 : index
    %c0_120 = arith.constant 0 : index
    %357 = vector.load %arg2[%c0_119, %c0_120] : memref<2x32xf32, #tpu.memory_space<vmem>>, vector<2x32xf32>
    %358 = arith.truncf %357 : vector<2x32xf32> to vector<2x32xbf16>
    %c64 = arith.constant 64 : index
    %c0_121 = arith.constant 0 : index
    %359 = vector.load %arg11[%c64, %c0_121] : memref<128x32xbf16, #tpu.memory_space<vmem>>, vector<32x32xbf16>
    %cst_122 = arith.constant dense<0.000000e+00> : vector<2x32xf32>
    %360 = tpu.matmul %358, %359, %cst_122 {dimension_numbers = #tpu.dot_dimension_numbers<[1], [0], [0], [1], [0, 0, 1, 1], [], []>} : vector<2x32xbf16>, vector<32x32xbf16>, vector<2x32xf32> -> vector<2x32xf32>
    %361 = arith.addf %356, %360 : vector<2x32xf32>
    %362 = vector.broadcast %4 : vector<1x32xf32> to vector<2x32xf32>
    %363 = arith.addf %361, %362 : vector<2x32xf32>
    %cst_123 = arith.constant 0.000000e+00 : f32
    %364 = vector.broadcast %cst_123 : f32 to vector<2x32xf32>
    %365 = arith.maximumf %363, %364 : vector<2x32xf32>
    %366 = arith.truncf %365 : vector<2x32xf32> to vector<2x32xbf16>
    %c96 = arith.constant 96 : index
    %c0_124 = arith.constant 0 : index
    %367 = vector.load %arg11[%c96, %c0_124] : memref<128x32xbf16, #tpu.memory_space<vmem>>, vector<32x32xbf16>
    %cst_125 = arith.constant dense<0.000000e+00> : vector<2x32xf32>
    %368 = tpu.matmul %366, %367, %cst_125 {dimension_numbers = #tpu.dot_dimension_numbers<[1], [0], [0], [1], [0, 0, 1, 1], [], []>} : vector<2x32xbf16>, vector<32x32xbf16>, vector<2x32xf32> -> vector<2x32xf32>
    %369 = vector.broadcast %5 : vector<1x32xf32> to vector<2x32xf32>
    %370 = arith.addf %368, %369 : vector<2x32xf32>
    %371 = vector.extract_strided_slice %370 {offsets = [0, 0], sizes = [2, 4], strides = [1, 1]} : vector<2x32xf32> to vector<2x4xf32>
    %372 = arith.negf %371 : vector<2x4xf32>
    %373 = math.exp %372 : vector<2x4xf32>
    %cst_126 = arith.constant 1.000000e+00 : f32
    %374 = vector.broadcast %cst_126 : f32 to vector<2x4xf32>
    %375 = arith.addf %374, %373 : vector<2x4xf32>
    %376 = arith.divf %374, %375 : vector<2x4xf32>
    %c0_127 = arith.constant 0 : index
    %c0_128 = arith.constant 0 : index
    %377 = vector.load %arg12[%c0_127, %c0_128] : memref<2x8xf32, #tpu.memory_space<vmem>>, vector<2x4xf32>
    tpu.vector_store %arg12[%c0_127, %c0_128], %376 {strides = array<i32>} : memref<2x8xf32, #tpu.memory_space<vmem>>, vector<2x4xf32>,
    %378 = vector.extract_strided_slice %370 {offsets = [0, 4], sizes = [2, 4], strides = [1, 1]} : vector<2x32xf32> to vector<2x4xf32>
    %379 = math.tanh %378 : vector<2x4xf32>
    %cst_129 = arith.constant 1.000000e+00 : f32
    %380 = vector.broadcast %cst_129 : f32 to vector<2x4xf32>
    %381 = arith.addf %379, %380 : vector<2x4xf32>
    %cst_130 = arith.constant 5.000000e-01 : f32
    %382 = vector.broadcast %cst_130 : f32 to vector<2x4xf32>
    %383 = arith.mulf %381, %382 : vector<2x4xf32>
    %c0_131 = arith.constant 0 : index
    %c4 = arith.constant 4 : index
    %384 = vector.load %arg12[%c0_131, %c4] : memref<2x8xf32, #tpu.memory_space<vmem>>, vector<2x4xf32>
    tpu.vector_store %arg12[%c0_131, %c4], %383 {strides = array<i32>} : memref<2x8xf32, #tpu.memory_space<vmem>>, vector<2x4xf32>,
    return
  }
}

</mosaic_0001>

<llo_original>
// kernel: emotion_model_forward.1
$region0: #{emotion_model_forward.1}
  #allocation0 [shape = 'u32[]', space=smem, size = 0x4, offset = 0x4, fixed_abs, tag = 'smem constant byte address 0x4 - core index']
  #allocation1 [shape = 'u32[144,128]{1,0:T(1,128)}', space=vmem, size = 0x12000, scoped, tag = 'internal scratch']
  %s0 = inlined_call_operand.vmem [shape: s32[16,1], index: 0, kind: input, shape index: {}]
  %s1 = inlined_call_operand.vmem [shape: f32[16,16], index: 1, kind: input, shape index: {}]
  %s2 = inlined_call_operand.vmem [shape: f32[2,32], index: 2, kind: input, shape index: {}]
  %s3 = inlined_call_operand.vmem [shape: bf16[100,32], index: 3, kind: input, shape index: {}]
  %s4 = inlined_call_operand.vmem [shape: f32[16,32], index: 4, kind: input, shape index: {}]
  %s5 = inlined_call_operand.vmem [shape: bf16[2,32,96], index: 5, kind: input, shape index: {}]
  %s6 = inlined_call_operand.vmem [shape: bf16[2,32,32], index: 6, kind: input, shape index: {}]
  %s7 = inlined_call_operand.vmem [shape: bf16[2,32,64], index: 7, kind: input, shape index: {}]
  %s8 = inlined_call_operand.vmem [shape: bf16[2,64,32], index: 8, kind: input, shape index: {}]
  %s9 = inlined_call_operand.vmem [shape: f32[2,8,128], index: 9, kind: input, shape index: {}]
  %s10 = inlined_call_operand.vmem [shape: f32[8,128], index: 10, kind: input, shape index: {}]
  %s11 = inlined_call_operand.vmem [shape: bf16[128,32], index: 11, kind: input, shape index: {}]
  %s12 = inlined_call_operand.vmem [shape: f32[2,8], index: 12, kind: output, shape index: {}]
  %s13 = sld [smem:[#allocation0]]
  $region58: #{emotion_model_forward.1} parent=0
    _
  %s15 = ssub.s32 1, %s13
  %s16 = scalar_select 0, %s15, %s13
  // Predicated region
  $region2: #{emotion_model_forward.1} parent=0 // pred_check
    _
  $region3: #{emotion_model_forward.1} parent=0 // pred_check_branch
    %18 = sbr.rel (0) target = $region5
  $region4: #{emotion_model_forward.1} parent=0 // pred_region
    _
  $region5: #{emotion_model_forward.1} parent=0 // pred_fallthru
    _
  // Predicated region
  $region6: #{emotion_model_forward.1} parent=0 // pred_check
    _
  $region7: #{emotion_model_forward.1} parent=0 // pred_check_branch
    %20 = sbr.rel (0) target = $region9
  $region8: #{emotion_model_forward.1} parent=0 // pred_region
    _
  $region9: #{emotion_model_forward.1} parent=0 // pred_fallthru
    _
  // Predicated region
  $region10: #{emotion_model_forward.1} parent=0 // pred_check
    _
  $region11: #{emotion_model_forward.1} parent=0 // pred_check_branch
    %22 = sbr.rel (0) target = $region13
  $region12: #{emotion_model_forward.1} parent=0 // pred_region
    _
  $region13: #{emotion_model_forward.1} parent=0 // pred_fallthru
    _
  // Predicated region
  $region14: #{emotion_model_forward.1} parent=0 // pred_check
    _
  $region15: #{emotion_model_forward.1} parent=0 // pred_check_branch
    %24 = sbr.rel (0) target = $region17
  $region16: #{emotion_model_forward.1} parent=0 // pred_region
    _
  $region17: #{emotion_model_forward.1} parent=0 // pred_fallthru
    _
  // Predicated region
  $region18: #{emotion_model_forward.1} parent=0 // pred_check
    _
  $region19: #{emotion_model_forward.1} parent=0 // pred_check_branch
    %26 = sbr.rel (0) target = $region21
  $region20: #{emotion_model_forward.1} parent=0 // pred_region
    _
  $region21: #{emotion_model_forward.1} parent=0 // pred_fallthru
    _
  // Predicated region
  $region22: #{emotion_model_forward.1} parent=0 // pred_check
    _
  $region23: #{emotion_model_forward.1} parent=0 // pred_check_branch
    %28 = sbr.rel (0) target = $region25
  $region24: #{emotion_model_forward.1} parent=0 // pred_region
    _
  $region25: #{emotion_model_forward.1} parent=0 // pred_fallthru
    _
  // Predicated region
  $region26: #{emotion_model_forward.1} parent=0 // pred_check
    _
  $region27: #{emotion_model_forward.1} parent=0 // pred_check_branch
    %30 = sbr.rel (0) target = $region29
  $region28: #{emotion_model_forward.1} parent=0 // pred_region
    _
  $region29: #{emotion_model_forward.1} parent=0 // pred_fallthru
    _
  // Predicated region
  $region30: #{emotion_model_forward.1} parent=0 // pred_check
    _
  $region31: #{emotion_model_forward.1} parent=0 // pred_check_branch
    %32 = sbr.rel (0) target = $region33
  $region32: #{emotion_model_forward.1} parent=0 // pred_region
    _
  $region33: #{emotion_model_forward.1} parent=0 // pred_fallthru
    _
  // Predicated region
  $region34: #{emotion_model_forward.1} parent=0 // pred_check
    _
  $region35: #{emotion_model_forward.1} parent=0 // pred_check_branch
    %34 = sbr.rel (0) target = $region37
  $region36: #{emotion_model_forward.1} parent=0 // pred_region
    _
  $region37: #{emotion_model_forward.1} parent=0 // pred_fallthru
    _
  // Predicated region
  $region38: #{emotion_model_forward.1} parent=0 // pred_check
    _
  $region39: #{emotion_model_forward.1} parent=0 // pred_check_branch
    %36 = sbr.rel (0) target = $region41
  $region40: #{emotion_model_forward.1} parent=0 // pred_region
    _
  $region41: #{emotion_model_forward.1} parent=0 // pred_fallthru
    _
  // Predicated region
  $region42: #{emotion_model_forward.1} parent=0 // pred_check
    _
  $region43: #{emotion_model_forward.1} parent=0 // pred_check_branch
    %38 = sbr.rel (0) target = $region45
  $region44: #{emotion_model_forward.1} parent=0 // pred_region
    _
  $region45: #{emotion_model_forward.1} parent=0 // pred_fallthru
    _
  // Predicated region
  $region46: #{emotion_model_forward.1} parent=0 // pred_check
    _
  $region47: #{emotion_model_forward.1} parent=0 // pred_check_branch
    %40 = sbr.rel (0) target = $region49
  $region48: #{emotion_model_forward.1} parent=0 // pred_region
    _
  $region49: #{emotion_model_forward.1} parent=0 // pred_fallthru
    _
  %v42 = vld [vmem:[%s10] sm:$0xff]
  %v43 = vld [vmem:[%s0] sm:$0xff]
  %v44 = vld [vmem:[%s0 + $0x8] sm:$0xff]
  %v45 = vlaneseq
  %v46 = vand.u32 %v45, 127
  %47 = vset.pattern.permute.xlu0 0
  %48 = vperm.xlu0 %47, %v43
  %v49 = vpop.permute.xlu0 %48
  %50 = vset.pattern.permute.xlu0 0
  %51 = vperm.xlu0 %50, %v44
  %v52 = vpop.permute.xlu0 %51
  %vm53 = vcmp.eq.s32.totalorder %v46, %v49
  %vm54 = vcmp.eq.s32.totalorder %v46, %v52
  %v55 = vsel %vm53, 1, 0
  %v56 = vsel %vm54, 1, 0
  %v57 = vcvt.s32.f32 %v55
  %v58 = vcvt.s32.f32 %v56
  %v59 = vpack.c.bf16 %v58, %v57
  %v60 = vld [vmem:[%s3] sm:$0xf]
  %v61 = vld [vmem:[%s3 + $0x4] sm:$0xf]
  %v62 = vld [vmem:[%s3 + $0x8] sm:$0xf]
  %v63 = vld [vmem:[%s3 + $0xc] sm:$0xf]
  %v64 = vld [vmem:[%s3 + $0x10] sm:$0xf]
  %v65 = vld [vmem:[%s3 + $0x14] sm:$0xf]
  %v66 = vld [vmem:[%s3 + $0x18] sm:$0xf]
  %v67 = vld [vmem:[%s3 + $0x1c] sm:$0xf]
  %v68 = vld [vmem:[%s3 + $0x20] sm:$0xf]
  %v69 = vld [vmem:[%s3 + $0x24] sm:$0xf]
  %v70 = vld [vmem:[%s3 + $0x28] sm:$0xf]
  %v71 = vld [vmem:[%s3 + $0x2c] sm:$0xf]
  %v72 = vld [vmem:[%s3 + $0x30] sm:$0x3]
  %v73 = vld [vmem:[%s4] sm:$0xff]
  %v74 = vld [vmem:[%s4 + $0x8] sm:$0xff]
  %v88 = vunpack.c.l.b16 %v60
  %v89 = vunpack.c.l.b16 %v61
  %v90 = vunpack.c.l.b16 %v62
  %v91 = vunpack.c.l.b16 %v63
  %v92 = vunpack.c.l.b16 %v64
  %v93 = vunpack.c.l.b16 %v65
  %v94 = vunpack.c.l.b16 %v66
  %v95 = vunpack.c.l.b16 %v67
  %v96 = vunpack.c.l.b16 %v68
  %v97 = vunpack.c.l.b16 %v69
  %v98 = vunpack.c.l.b16 %v70
  %v99 = vunpack.c.l.b16 %v71
  %v100 = vunpack.c.l.b16 %v72
  %v101 = vpack.c.b16 %v89, %v88
  %v102 = vpack.c.b16 %v91, %v90
  %v103 = vpack.c.b16 %v93, %v92
  %v104 = vpack.c.b16 %v95, %v94
  %v105 = vpack.c.b16 %v97, %v96
  %v106 = vpack.c.b16 %v99, %v98
  %v107 = vpack.c.b16 %v100, %v100
  %vm114 = vcmask 818176
  %v116 = vsel %vm114, %v59, 0
  %vm118 = vcmask 1041408
  %v120 = vsel %vm118, %v107, 0
  %122 = vmatprep.subr.bf16.mxu0 0
  %123 = vmatpush1.bf16.msra.mxu0 0
  %124 = vmatprep.subr.bf16.mxu0 0
  %125 = vmatpush1.bf16.msra.mxu0 %v120
  %126 = vmatprep.subr.bf16.mxu0 0
  %127 = vmatpush1.bf16.msra.mxu0 %v106
  %128 = vmatprep.subr.bf16.mxu0 0
  %129 = vmatpush1.bf16.msra.mxu0 %v105
  %130 = vmatprep.subr.bf16.mxu0 0
  %131 = vmatpush1.bf16.msra.mxu0 %v104
  %132 = vmatprep.subr.bf16.mxu0 0
  %133 = vmatpush1.bf16.msra.mxu0 %v103
  %134 = vmatprep.subr.bf16.mxu0 0
  %135 = vmatpush1.bf16.msra.mxu0 %v102
  %136 = vmatprep.subr.bf16.mxu0 0
  %137 = vmatpush1.bf16.msra.mxu0 %v101
  %138 = vmatprep.subr.bf16.mxu0 0
  %139 = vmatpush2.bf16.msra.mxu0 0
  %140 = vmatprep.subr.bf16.mxu0 0
  %141 = vmatpush2.bf16.msra.mxu0 0
  %142 = vmatprep.subr.bf16.mxu0 0
  %143 = vmatpush2.bf16.msra.mxu0 0
  %144 = vmatprep.subr.bf16.mxu0 0
  %145 = vmatpush2.bf16.msra.mxu0 0
  %146 = vmatprep.subr.bf16.mxu0 0
  %147 = vmatpush2.bf16.msra.mxu0 0
  %148 = vmatprep.subr.bf16.mxu0 0
  %149 = vmatpush2.bf16.msra.mxu0 0
  %150 = vmatprep.subr.bf16.mxu0 0
  %151 = vmatpush2.bf16.msra.mxu0 0
  %152 = vmatprep.subr.bf16.mxu0 0
  %153 = vmatpush2.bf16.msra.mxu0 0
  %154 = vmatprep.mubr.bf16.mxu0 0
  %155 = vmatmul.mubr.bf16.gmra.mxu0 %v116
  %v156 = vpop.f32.mrf.mxu0
  %v157 = vadd.f32 %v73, %v156
  %v158 = vpop.f32.mrf.mxu0
  %v159 = vpop.f32.mrf.mxu0
  %v160 = vadd.f32 %v74, %v159
  %v161 = vpop.f32.mrf.mxu0
  %162 = vdwg.mxu0
  %vm163 = vcmask 261120
  %v164 = vsel %vm163, %v157, 0.0
  %165 = vadd.xlane.f32.xlu0 %v164
  %v166 = vpop.xlane.xlu0 %165
  %v167 = vsel %vm163, %v160, 0.0
  %168 = vadd.xlane.f32.xlu0 %v167
  %v169 = vpop.xlane.xlu0 %168
  %v170 = vrcp.pop 32.0
  %v171 = vmul.f32 %v166, %v170
  %v172 = vmul.f32 %v169, %v170
  %v173 = vmul.f32 %v157, %v157
  %v174 = vmul.f32 %v160, %v160
  %v175 = vsel %vm163, %v173, 0.0
  %176 = vadd.xlane.f32.xlu0 %v175
  %v177 = vpop.xlane.xlu0 %176
  %v178 = vsel %vm163, %v174, 0.0
  %179 = vadd.xlane.f32.xlu0 %v178
  %v180 = vpop.xlane.xlu0 %179
  %v181 = vmul.f32 %v177, %v170
  %v182 = vmul.f32 %v180, %v170
  %v183 = vmul.f32 %v171, %v171
  %v184 = vmul.f32 %v172, %v172
  %v185 = vsub.f32 %v181, %v183
  %v186 = vsub.f32 %v182, %v184
  %v187 = vmax.f32 %v185, 0.0
  %v188 = vmax.f32 %v186, 0.0
  %v189 = vsub.f32 %v157, %v171
  %v190 = vsub.f32 %v160, %v172
  %v191 = vadd.f32 %v187, 1e-12
  %v192 = vadd.f32 %v188, 1e-12
  %v193 = vrsqrt.pop %v191
  %v194 = vrsqrt.pop %v192
  %v195 = vmul.f32 %v189, %v193
  %v196 = vmul.f32 %v190, %v194
  %v197 = vlaneseq
  %v198 = vshrl.u32 %v197, 7
  %v199 = vsub.s32 0, %v198
  %v200 = vrot.slane %v42, %v199
  %v201 = vmul.f32 %v195, %v200
  %v202 = vmul.f32 %v196, %v200
  %v203 = vlaneseq
  %v204 = vshrl.u32 %v203, 7
  %v205 = vsub.s32 1, %v204
  %v206 = vrot.slane %v42, %v205
  %v207 = vadd.f32 %v201, %v206
  %v208 = vadd.f32 %v202, %v206
  %v209 = vld [vmem:[%s1] sm:$0xff]
  %v210 = vld [vmem:[%s1 + $0x8] sm:$0xff]
  %v211 = vld [vmem:[%s9] sm:$0xff]
  %v212 = vpack.c.bf16 %v208, %v207
  %v213 = vld [vmem:[%s5] sm:$0xf]
  %v214 = vld [vmem:[%s5 + $0x4] sm:$0xf]
  %v215 = vld [vmem:[%s5 + $0x8] sm:$0xf]
  %v216 = vld [vmem:[%s5 + $0xc] sm:$0xf]
  %v217 = vlaneseq
  %v218 = vshrl.u32 %v217, 7
  %v219 = vsub.s32 0, %v218
  %v220 = vrot.slane %v211, %v219
  %v225 = vunpack.c.l.b16 %v213
  %v226 = vunpack.c.l.b16 %v214
  %v227 = vunpack.c.l.b16 %v215
  %v228 = vunpack.c.l.b16 %v216
  %v229 = vpack.c.b16 %v226, %v225
  %v230 = vpack.c.b16 %v228, %v227
  %v234 = vsel %vm163, %v212, 0
  %236 = vmatprep.subr.bf16.mxu0 0
  %237 = vmatpush1.bf16.msra.mxu0 0
  %238 = vmatprep.subr.bf16.mxu0 0
  %239 = vmatpush1.bf16.msra.mxu0 0
  %240 = vmatprep.subr.bf16.mxu0 0
  %241 = vmatpush1.bf16.msra.mxu0 0
  %242 = vmatprep.subr.bf16.mxu0 0
  %243 = vmatpush1.bf16.msra.mxu0 0
  %244 = vmatprep.subr.bf16.mxu0 0
  %245 = vmatpush1.bf16.msra.mxu0 0
  %246 = vmatprep.subr.bf16.mxu0 0
  %247 = vmatpush1.bf16.msra.mxu0 0
  %248 = vmatprep.subr.bf16.mxu0 0
  %249 = vmatpush1.bf16.msra.mxu0 %v230
  %250 = vmatprep.subr.bf16.mxu0 0
  %251 = vmatpush1.bf16.msra.mxu0 %v229
  %252 = vmatprep.subr.bf16.mxu0 0
  %253 = vmatpush2.bf16.msra.mxu0 0
  %254 = vmatprep.subr.bf16.mxu0 0
  %255 = vmatpush2.bf16.msra.mxu0 0
  %256 = vmatprep.subr.bf16.mxu0 0
  %257 = vmatpush2.bf16.msra.mxu0 0
  %258 = vmatprep.subr.bf16.mxu0 0
  %259 = vmatpush2.bf16.msra.mxu0 0
  %260 = vmatprep.subr.bf16.mxu0 0
  %261 = vmatpush2.bf16.msra.mxu0 0
  %262 = vmatprep.subr.bf16.mxu0 0
  %263 = vmatpush2.bf16.msra.mxu0 0
  %264 = vmatprep.subr.bf16.mxu0 0
  %265 = vmatpush2.bf16.msra.mxu0 0
  %266 = vmatprep.subr.bf16.mxu0 0
  %267 = vmatpush2.bf16.msra.mxu0 0
  %268 = vmatprep.mubr.bf16.mxu0 0
  %269 = vmatmul.mubr.bf16.gmra.mxu0 %v234
  %v270 = vpop.f32.mrf.mxu0
  %v271 = vadd.f32 %v220, %v270
  %v272 = vpop.f32.mrf.mxu0
  %v273 = vpop.f32.mrf.mxu0
  %v274 = vadd.f32 %v220, %v273
  %v275 = vpop.f32.mrf.mxu0
  %276 = vdwg.mxu0
  %v277 = vpack.c.bf16 %v274, %v271
  %279 = vrot.lane.b32.xlu0 %v277, 96
  %v280 = vpop.permute.xlu0 %279
  %vm281 = vcmask 130048
  %v283 = vsel %vm281, %v277, 0
  %v286 = vsel %vm281, %v280, 0
  %288 = vmatprep.subr.bf16.mxu0 0
  %289 = vmatpush1.bf16.xpose.msra.mxu0 0
  %290 = vmatprep.subr.bf16.mxu0 0
  %291 = vmatpush1.bf16.xpose.msra.mxu0 0
  %292 = vmatprep.subr.bf16.mxu0 0
  %293 = vmatpush1.bf16.xpose.msra.mxu0 0
  %294 = vmatprep.subr.bf16.mxu0 0
  %295 = vmatpush1.bf16.xpose.msra.mxu0 0
  %296 = vmatprep.subr.bf16.mxu0 0
  %297 = vmatpush1.bf16.xpose.msra.mxu0 0
  %298 = vmatprep.subr.bf16.mxu0 0
  %299 = vmatpush1.bf16.xpose.msra.mxu0 0
  %300 = vmatprep.subr.bf16.mxu0 0
  %301 = vmatpush1.bf16.xpose.msra.mxu0 0
  %302 = vmatprep.subr.bf16.mxu0 0
  %303 = vmatpush1.bf16.xpose.msra.mxu0 %v286
  %304 = vmatprep.subr.bf16.mxu0 0
  %305 = vmatpush2.bf16.xpose.msra.mxu0 0
  %306 = vmatprep.subr.bf16.mxu0 0
  %307 = vmatpush2.bf16.xpose.msra.mxu0 0
  %308 = vmatprep.subr.bf16.mxu0 0
  %309 = vmatpush2.bf16.xpose.msra.mxu0 0
  %310 = vmatprep.subr.bf16.mxu0 0
  %311 = vmatpush2.bf16.xpose.msra.mxu0 0
  %312 = vmatprep.subr.bf16.mxu0 0
  %313 = vmatpush2.bf16.xpose.msra.mxu0 0
  %314 = vmatprep.subr.bf16.mxu0 0
  %315 = vmatpush2.bf16.xpose.msra.mxu0 0
  %316 = vmatprep.subr.bf16.mxu0 0
  %317 = vmatpush2.bf16.xpose.msra.mxu0 0
  %318 = vmatprep.subr.bf16.mxu0 0
  %319 = vmatpush2.bf16.xpose.msra.mxu0 0
  %320 = vmatprep.mubr.bf16.mxu0 0
  %321 = vmatmul.mubr.bf16.gmra.mxu0 %v283
  %v322 = vpop.f32.mrf.mxu0
  %v323 = vadd.f32 0.0, %v322
  %v324 = vpop.f32.mrf.mxu0
  %v325 = vpop.f32.mrf.mxu0
  %v326 = vadd.f32 0.0, %v325
  %v327 = vpop.f32.mrf.mxu0
  %328 = vdwg.mxu0
  %v329 = vmul.f32 %v323, 0.25
  %v330 = vmul.f32 %v326, 0.25
  %v331 = vadd.f32 %v329, %v209
  %v332 = vadd.f32 %v330, %v210
  %v333 = vsel %vm281, %v331, -inf
  %334 = vmax.xlane.f32.xlu0 %v333
  %v335 = vpop.xlane.xlu0 %334
  %v336 = vsel %vm281, %v332, -inf
  %337 = vmax.xlane.f32.xlu0 %v336
  %v338 = vpop.xlane.xlu0 %337
  %v339 = vsub.f32 %v331, %v335
  %v340 = vsub.f32 %v332, %v338
  %v341 = vmul.f32 %v339, 1.442695
  %v342 = vpow.pop %v341
  %v343 = vmul.f32 %v340, 1.442695
  %v344 = vpow.pop %v343
  %v345 = vsel %vm281, %v342, 0.0
  %346 = vadd.xlane.f32.xlu0 %v345
  %v347 = vpop.xlane.xlu0 %346
  %v348 = vsel %vm281, %v344, 0.0
  %349 = vadd.xlane.f32.xlu0 %v348
  %v350 = vpop.xlane.xlu0 %349
  %v351 = vrcp.pop %v347
  %v352 = vrcp.pop %v350
  %v353 = vmul.f32 %v342, %v351
  %v354 = vmul.f32 %v344, %v352
  %v355 = vpack.c.bf16 %v354, %v353
  %356 = vrot.lane.b32.xlu0 %v277, 64
  %v357 = vpop.permute.xlu0 %356
  %v360 = vsel %vm281, %v355, 0
  %362 = vmatprep.subr.bf16.mxu0 0
  %363 = vmatpush1.bf16.msra.mxu0 0
  %364 = vmatprep.subr.bf16.mxu0 0
  %365 = vmatpush1.bf16.msra.mxu0 0
  %366 = vmatprep.subr.bf16.mxu0 0
  %367 = vmatpush1.bf16.msra.mxu0 0
  %368 = vmatprep.subr.bf16.mxu0 0
  %369 = vmatpush1.bf16.msra.mxu0 0
  %370 = vmatprep.subr.bf16.mxu0 0
  %371 = vmatpush1.bf16.msra.mxu0 0
  %372 = vmatprep.subr.bf16.mxu0 0
  %373 = vmatpush1.bf16.msra.mxu0 0
  %374 = vmatprep.subr.bf16.mxu0 0
  %375 = vmatpush1.bf16.msra.mxu0 0
  %376 = vmatprep.subr.bf16.mxu0 0
  %377 = vmatpush1.bf16.msra.mxu0 %v357
  %378 = vmatprep.subr.bf16.mxu0 0
  %379 = vmatpush2.bf16.msra.mxu0 0
  %380 = vmatprep.subr.bf16.mxu0 0
  %381 = vmatpush2.bf16.msra.mxu0 0
  %382 = vmatprep.subr.bf16.mxu0 0
  %383 = vmatpush2.bf16.msra.mxu0 0
  %384 = vmatprep.subr.bf16.mxu0 0
  %385 = vmatpush2.bf16.msra.mxu0 0
  %386 = vmatprep.subr.bf16.mxu0 0
  %387 = vmatpush2.bf16.msra.mxu0 0
  %388 = vmatprep.subr.bf16.mxu0 0
  %389 = vmatpush2.bf16.msra.mxu0 0
  %390 = vmatprep.subr.bf16.mxu0 0
  %391 = vmatpush2.bf16.msra.mxu0 0
  %392 = vmatprep.subr.bf16.mxu0 0
  %393 = vmatpush2.bf16.msra.mxu0 0
  %394 = vmatprep.mubr.bf16.mxu0 0
  %395 = vmatmul.mubr.bf16.gmra.mxu0 %v360
  %v396 = vpop.f32.mrf.mxu0
  %v397 = vadd.f32 0.0, %v396
  %v398 = vpop.f32.mrf.mxu0
  %v399 = vpop.f32.mrf.mxu0
  %v400 = vadd.f32 0.0, %v399
  %v401 = vpop.f32.mrf.mxu0
  %402 = vdwg.mxu0
  %v403 = vpack.c.bf16 %v400, %v397
  %v404 = vld [vmem:[%s6] sm:$0xf]
  %v405 = vld [vmem:[%s6 + $0x4] sm:$0xf]
  %406 = vrot.lane.b32.xlu0 %v277, 112
  %v407 = vpop.permute.xlu0 %406
  %408 = vrot.lane.b32.xlu0 %v277, 80
  %v409 = vpop.permute.xlu0 %408
  %v411 = vsel %vm281, %v407, 0
  %v414 = vsel %vm281, %v409, 0
  %416 = vmatprep.subr.bf16.mxu0 0
  %417 = vmatpush1.bf16.xpose.msra.mxu0 0
  %418 = vmatprep.subr.bf16.mxu0 0
  %419 = vmatpush1.bf16.xpose.msra.mxu0 0
  %420 = vmatprep.subr.bf16.mxu0 0
  %421 = vmatpush1.bf16.xpose.msra.mxu0 0
  %422 = vmatprep.subr.bf16.mxu0 0
  %423 = vmatpush1.bf16.xpose.msra.mxu0 0
  %424 = vmatprep.subr.bf16.mxu0 0
  %425 = vmatpush1.bf16.xpose.msra.mxu0 0
  %426 = vmatprep.subr.bf16.mxu0 0
  %427 = vmatpush1.bf16.xpose.msra.mxu0 0
  %428 = vmatprep.subr.bf16.mxu0 0
  %429 = vmatpush1.bf16.xpose.msra.mxu0 0
  %430 = vmatprep.subr.bf16.mxu0 0
  %431 = vmatpush1.bf16.xpose.msra.mxu0 %v414
  %432 = vmatprep.subr.bf16.mxu0 0
  %433 = vmatpush2.bf16.xpose.msra.mxu0 0
  %434 = vmatprep.subr.bf16.mxu0 0
  %435 = vmatpush2.bf16.xpose.msra.mxu0 0
  %436 = vmatprep.subr.bf16.mxu0 0
  %437 = vmatpush2.bf16.xpose.msra.mxu0 0
  %438 = vmatprep.subr.bf16.mxu0 0
  %439 = vmatpush2.bf16.xpose.msra.mxu0 0
  %440 = vmatprep.subr.bf16.mxu0 0
  %441 = vmatpush2.bf16.xpose.msra.mxu0 0
  %442 = vmatprep.subr.bf16.mxu0 0
  %443 = vmatpush2.bf16.xpose.msra.mxu0 0
  %444 = vmatprep.subr.bf16.mxu0 0
  %445 = vmatpush2.bf16.xpose.msra.mxu0 0
  %446 = vmatprep.subr.bf16.mxu0 0
  %447 = vmatpush2.bf16.xpose.msra.mxu0 0
  %448 = vmatprep.mubr.bf16.mxu0 0
  %449 = vmatmul.mubr.bf16.gmra.mxu0 %v411
  %v450 = vpop.f32.mrf.mxu0
  %v451 = vadd.f32 0.0, %v450
  %v452 = vpop.f32.mrf.mxu0
  %v453 = vpop.f32.mrf.mxu0
  %v454 = vadd.f32 0.0, %v453
  %v455 = vpop.f32.mrf.mxu0
  %456 = vdwg.mxu0
  %v457 = vmul.f32 %v451, 0.25
  %v458 = vmul.f32 %v454, 0.25
  %v459 = vadd.f32 %v457, %v209
  %v460 = vadd.f32 %v458, %v210
  %v461 = vsel %vm281, %v459, -inf
  %462 = vmax.xlane.f32.xlu0 %v461
  %v463 = vpop.xlane.xlu0 %462
  %v464 = vsel %vm281, %v460, -inf
  %465 = vmax.xlane.f32.xlu0 %v464
  %v466 = vpop.xlane.xlu0 %465
  %v467 = vsub.f32 %v459, %v463
  %v468 = vsub.f32 %v460, %v466
  %v469 = vmul.f32 %v467, 1.442695
  %v470 = vpow.pop %v469
  %v471 = vmul.f32 %v468, 1.442695
  %v472 = vpow.pop %v471
  %v473 = vsel %vm281, %v470, 0.0
  %474 = vadd.xlane.f32.xlu0 %v473
  %v475 = vpop.xlane.xlu0 %474
  %v476 = vsel %vm281, %v472, 0.0
  %477 = vadd.xlane.f32.xlu0 %v476
  %v478 = vpop.xlane.xlu0 %477
  %v479 = vrcp.pop %v475
  %v480 = vrcp.pop %v478
  %v481 = vmul.f32 %v470, %v479
  %v482 = vmul.f32 %v472, %v480
  %v483 = vpack.c.bf16 %v482, %v481
  %484 = vrot.lane.b32.xlu0 %v277, 48
  %v485 = vpop.permute.xlu0 %484
  %v488 = vsel %vm281, %v483, 0
  %490 = vmatprep.subr.bf16.mxu0 0
  %491 = vmatpush1.bf16.msra.mxu0 0
  %492 = vmatprep.subr.bf16.mxu0 0
  %493 = vmatpush1.bf16.msra.mxu0 0
  %494 = vmatprep.subr.bf16.mxu0 0
  %495 = vmatpush1.bf16.msra.mxu0 0
  %496 = vmatprep.subr.bf16.mxu0 0
  %497 = vmatpush1.bf16.msra.mxu0 0
  %498 = vmatprep.subr.bf16.mxu0 0
  %499 = vmatpush1.bf16.msra.mxu0 0
  %500 = vmatprep.subr.bf16.mxu0 0
  %501 = vmatpush1.bf16.msra.mxu0 0
  %502 = vmatprep.subr.bf16.mxu0 0
  %503 = vmatpush1.bf16.msra.mxu0 0
  %504 = vmatprep.subr.bf16.mxu0 0
  %505 = vmatpush1.bf16.msra.mxu0 %v485
  %506 = vmatprep.subr.bf16.mxu0 0
  %507 = vmatpush2.bf16.msra.mxu0 0
  %508 = vmatprep.subr.bf16.mxu0 0
  %509 = vmatpush2.bf16.msra.mxu0 0
  %510 = vmatprep.subr.bf16.mxu0 0
  %511 = vmatpush2.bf16.msra.mxu0 0
  %512 = vmatprep.subr.bf16.mxu0 0
  %513 = vmatpush2.bf16.msra.mxu0 0
  %514 = vmatprep.subr.bf16.mxu0 0
  %515 = vmatpush2.bf16.msra.mxu0 0
  %516 = vmatprep.subr.bf16.mxu0 0
  %517 = vmatpush2.bf16.msra.mxu0 0
  %518 = vmatprep.subr.bf16.mxu0 0
  %519 = vmatpush2.bf16.msra.mxu0 0
  %520 = vmatprep.subr.bf16.mxu0 0
  %521 = vmatpush2.bf16.msra.mxu0 0
  %522 = vmatprep.mubr.bf16.mxu0 0
  %523 = vmatmul.mubr.bf16.gmra.mxu0 %v488
  %v524 = vpop.f32.mrf.mxu0
  %v525 = vadd.f32 0.0, %v524
  %v526 = vpop.f32.mrf.mxu0
  %v527 = vpop.f32.mrf.mxu0
  %v528 = vadd.f32 0.0, %v527
  %v529 = vpop.f32.mrf.mxu0
  %530 = vdwg.mxu0
  %v531 = vpack.c.bf16 %v528, %v525
  %v532 = vld [vmem:[%s6 + $0x8] sm:$0xf]
  %v533 = vld [vmem:[%s6 + $0xc] sm:$0xf]
  %v536 = vunpack.c.l.b16 %v532
  %v537 = vunpack.c.l.b16 %v533
  %v538 = vpack.c.b16 %v537, %v536
  %v541 = vsel %vm281, %v531, 0
  %543 = vmatprep.subr.bf16.mxu0 0
  %544 = vmatpush1.bf16.msra.mxu0 0
  %545 = vmatprep.subr.bf16.mxu0 0
  %546 = vmatpush1.bf16.msra.mxu0 0
  %547 = vmatprep.subr.bf16.mxu0 0
  %548 = vmatpush1.bf16.msra.mxu0 0
  %549 = vmatprep.subr.bf16.mxu0 0
  %550 = vmatpush1.bf16.msra.mxu0 0
  %551 = vmatprep.subr.bf16.mxu0 0
  %552 = vmatpush1.bf16.msra.mxu0 0
  %553 = vmatprep.subr.bf16.mxu0 0
  %554 = vmatpush1.bf16.msra.mxu0 0
  %555 = vmatprep.subr.bf16.mxu0 0
  %556 = vmatpush1.bf16.msra.mxu0 0
  %557 = vmatprep.subr.bf16.mxu0 0
  %558 = vmatpush1.bf16.msra.mxu0 %v538
  %559 = vmatprep.subr.bf16.mxu0 0
  %560 = vmatpush2.bf16.msra.mxu0 0
  %561 = vmatprep.subr.bf16.mxu0 0
  %562 = vmatpush2.bf16.msra.mxu0 0
  %563 = vmatprep.subr.bf16.mxu0 0
  %564 = vmatpush2.bf16.msra.mxu0 0
  %565 = vmatprep.subr.bf16.mxu0 0
  %566 = vmatpush2.bf16.msra.mxu0 0
  %567 = vmatprep.subr.bf16.mxu0 0
  %568 = vmatpush2.bf16.msra.mxu0 0
  %569 = vmatprep.subr.bf16.mxu0 0
  %570 = vmatpush2.bf16.msra.mxu0 0
  %571 = vmatprep.subr.bf16.mxu0 0
  %572 = vmatpush2.bf16.msra.mxu0 0
  %573 = vmatprep.subr.bf16.mxu0 0
  %574 = vmatpush2.bf16.msra.mxu0 0
  %575 = vmatprep.mubr.bf16.mxu0 0
  %576 = vmatmul.mubr.bf16.gmra.mxu0 %v541
  %v577 = vpop.f32.mrf.mxu0
  %v578 = vadd.f32 0.0, %v577
  %v579 = vpop.f32.mrf.mxu0
  %v580 = vpop.f32.mrf.mxu0
  %v581 = vadd.f32 0.0, %v580
  %v582 = vpop.f32.mrf.mxu0
  %583 = vdwg.mxu0
  %v586 = vunpack.c.l.b16 %v404
  %v587 = vunpack.c.l.b16 %v405
  %v588 = vpack.c.b16 %v587, %v586
  %v591 = vsel %vm281, %v403, 0
  %593 = vmatprep.subr.bf16.mxu0 0
  %594 = vmatpush1.bf16.msra.mxu0 0
  %595 = vmatprep.subr.bf16.mxu0 0
  %596 = vmatpush1.bf16.msra.mxu0 0
  %597 = vmatprep.subr.bf16.mxu0 0
  %598 = vmatpush1.bf16.msra.mxu0 0
  %599 = vmatprep.subr.bf16.mxu0 0
  %600 = vmatpush1.bf16.msra.mxu0 0
  %601 = vmatprep.subr.bf16.mxu0 0
  %602 = vmatpush1.bf16.msra.mxu0 0
  %603 = vmatprep.subr.bf16.mxu0 0
  %604 = vmatpush1.bf16.msra.mxu0 0
  %605 = vmatprep.subr.bf16.mxu0 0
  %606 = vmatpush1.bf16.msra.mxu0 0
  %607 = vmatprep.subr.bf16.mxu0 0
  %608 = vmatpush1.bf16.msra.mxu0 %v588
  %609 = vmatprep.subr.bf16.mxu0 0
  %610 = vmatpush2.bf16.msra.mxu0 0
  %611 = vmatprep.subr.bf16.mxu0 0
  %612 = vmatpush2.bf16.msra.mxu0 0
  %613 = vmatprep.subr.bf16.mxu0 0
  %614 = vmatpush2.bf16.msra.mxu0 0
  %615 = vmatprep.subr.bf16.mxu0 0
  %616 = vmatpush2.bf16.msra.mxu0 0
  %617 = vmatprep.subr.bf16.mxu0 0
  %618 = vmatpush2.bf16.msra.mxu0 0
  %619 = vmatprep.subr.bf16.mxu0 0
  %620 = vmatpush2.bf16.msra.mxu0 0
  %621 = vmatprep.subr.bf16.mxu0 0
  %622 = vmatpush2.bf16.msra.mxu0 0
  %623 = vmatprep.subr.bf16.mxu0 0
  %624 = vmatpush2.bf16.msra.mxu0 0
  %625 = vmatprep.mubr.bf16.mxu0 0
  %626 = vmatmul.mubr.bf16.gmra.mxu0 %v591
  %v627 = vpop.f32.mrf.mxu0
  %v628 = vadd.f32 %v578, %v627
  %v629 = vpop.f32.mrf.mxu0
  %v630 = vpop.f32.mrf.mxu0
  %v631 = vadd.f32 %v581, %v630
  %v632 = vpop.f32.mrf.mxu0
  %633 = vdwg.mxu0
  %v634 = vadd.f32 %v207, %v628
  %v635 = vadd.f32 %v208, %v631
  %v636 = vlaneseq
  %v637 = vshrl.u32 %v636, 7
  %v638 = vsub.s32 1, %v637
  %v639 = vrot.slane %v211, %v638
  %v640 = vadd.f32 %v634, %v639
  %v641 = vadd.f32 %v635, %v639
  %v642 = vsel %vm163, %v640, 0.0
  %643 = vadd.xlane.f32.xlu0 %v642
  %v644 = vpop.xlane.xlu0 %643
  %v645 = vsel %vm163, %v641, 0.0
  %646 = vadd.xlane.f32.xlu0 %v645
  %v647 = vpop.xlane.xlu0 %646
  %v648 = vmul.f32 %v644, %v170
  %v649 = vmul.f32 %v647, %v170
  %v650 = vmul.f32 %v640, %v640
  %v651 = vmul.f32 %v641, %v641
  %v652 = vsel %vm163, %v650, 0.0
  %653 = vadd.xlane.f32.xlu0 %v652
  %v654 = vpop.xlane.xlu0 %653
  %v655 = vsel %vm163, %v651, 0.0
  %656 = vadd.xlane.f32.xlu0 %v655
  %v657 = vpop.xlane.xlu0 %656
  %v658 = vmul.f32 %v654, %v170
  %v659 = vmul.f32 %v657, %v170
  %v660 = vmul.f32 %v648, %v648
  %v661 = vmul.f32 %v649, %v649
  %v662 = vsub.f32 %v658, %v660
  %v663 = vsub.f32 %v659, %v661
  %v664 = vmax.f32 %v662, 0.0
  %v665 = vmax.f32 %v663, 0.0
  %v666 = vsub.f32 %v640, %v648
  %v667 = vsub.f32 %v641, %v649
  %v668 = vadd.f32 %v664, 1e-12
  %v669 = vadd.f32 %v665, 1e-12
  %v670 = vrsqrt.pop %v668
  %v671 = vrsqrt.pop %v669
  %v672 = vmul.f32 %v666, %v670
  %v673 = vmul.f32 %v667, %v671
  %v674 = vlaneseq
  %v675 = vshrl.u32 %v674, 7
  %v676 = vsub.s32 4, %v675
  %v677 = vrot.slane %v211, %v676
  %v678 = vmul.f32 %v672, %v677
  %v679 = vmul.f32 %v673, %v677
  %v680 = vlaneseq
  %v681 = vshrl.u32 %v680, 7
  %v682 = vsub.s32 5, %v681
  %v683 = vrot.slane %v211, %v682
  %v684 = vadd.f32 %v678, %v683
  %v685 = vadd.f32 %v679, %v683
  %v686 = vpack.c.bf16 %v685, %v684
  %v687 = vld [vmem:[%s7] sm:$0xf]
  %v688 = vld [vmem:[%s7 + $0x4] sm:$0xf]
  %v689 = vld [vmem:[%s7 + $0x8] sm:$0xf]
  %v690 = vld [vmem:[%s7 + $0xc] sm:$0xf]
  %v691 = vlaneseq
  %v692 = vshrl.u32 %v691, 7
  %v693 = vsub.s32 2, %v692
  %v694 = vrot.slane %v211, %v693
  %v699 = vunpack.c.l.b16 %v687
  %v700 = vunpack.c.l.b16 %v688
  %v701 = vunpack.c.l.b16 %v689
  %v702 = vunpack.c.l.b16 %v690
  %v703 = vpack.c.b16 %v700, %v699
  %v704 = vpack.c.b16 %v702, %v701
  %v708 = vsel %vm163, %v686, 0
  %710 = vmatprep.subr.bf16.mxu0 0
  %711 = vmatpush1.bf16.msra.mxu0 0
  %712 = vmatprep.subr.bf16.mxu0 0
  %713 = vmatpush1.bf16.msra.mxu0 0
  %714 = vmatprep.subr.bf16.mxu0 0
  %715 = vmatpush1.bf16.msra.mxu0 0
  %716 = vmatprep.subr.bf16.mxu0 0
  %717 = vmatpush1.bf16.msra.mxu0 0
  %718 = vmatprep.subr.bf16.mxu0 0
  %719 = vmatpush1.bf16.msra.mxu0 0
  %720 = vmatprep.subr.bf16.mxu0 0
  %721 = vmatpush1.bf16.msra.mxu0 0
  %722 = vmatprep.subr.bf16.mxu0 0
  %723 = vmatpush1.bf16.msra.mxu0 %v704
  %724 = vmatprep.subr.bf16.mxu0 0
  %725 = vmatpush1.bf16.msra.mxu0 %v703
  %726 = vmatprep.subr.bf16.mxu0 0
  %727 = vmatpush2.bf16.msra.mxu0 0
  %728 = vmatprep.subr.bf16.mxu0 0
  %729 = vmatpush2.bf16.msra.mxu0 0
  %730 = vmatprep.subr.bf16.mxu0 0
  %731 = vmatpush2.bf16.msra.mxu0 0
  %732 = vmatprep.subr.bf16.mxu0 0
  %733 = vmatpush2.bf16.msra.mxu0 0
  %734 = vmatprep.subr.bf16.mxu0 0
  %735 = vmatpush2.bf16.msra.mxu0 0
  %736 = vmatprep.subr.bf16.mxu0 0
  %737 = vmatpush2.bf16.msra.mxu0 0
  %738 = vmatprep.subr.bf16.mxu0 0
  %739 = vmatpush2.bf16.msra.mxu0 0
  %740 = vmatprep.subr.bf16.mxu0 0
  %741 = vmatpush2.bf16.msra.mxu0 0
  %742 = vmatprep.mubr.bf16.mxu0 0
  %743 = vmatmul.mubr.bf16.gmra.mxu0 %v708
  %v744 = vpop.f32.mrf.mxu0
  %v745 = vadd.f32 %v694, %v744
  %v746 = vpop.f32.mrf.mxu0
  %v747 = vpop.f32.mrf.mxu0
  %v748 = vadd.f32 %v694, %v747
  %v749 = vpop.f32.mrf.mxu0
  %750 = vdwg.mxu0
  %v751 = vmul.f32 %v745, %v745
  %v752 = vmul.f32 %v748, %v748
  %v753 = vmul.f32 %v745, %v751
  %v754 = vmul.f32 %v748, %v752
  %v755 = vmul.f32 %v753, 0.044715
  %v756 = vmul.f32 %v754, 0.044715
  %v757 = vadd.f32 %v745, %v755
  %v758 = vadd.f32 %v748, %v756
  %v759 = vmul.f32 %v757, 0.7978846
  %v760 = vmul.f32 %v758, 0.7978846
  %v761 = vtanh.pop %v759
  %v762 = vtanh.pop %v760
  %v763 = vadd.f32 %v761, 1.0
  %v764 = vadd.f32 %v762, 1.0
  %v765 = vmul.f32 %v763, 0.5
  %v766 = vmul.f32 %v764, 0.5
  %v767 = vmul.f32 %v745, %v765
  %v768 = vmul.f32 %v748, %v766
  %v769 = vpack.c.bf16 %v768, %v767
  %v770 = vld [vmem:[%s8] sm:$0xf]
  %v771 = vld [vmem:[%s8 + $0x4] sm:$0xf]
  %v772 = vld [vmem:[%s8 + $0x8] sm:$0xf]
  %v773 = vld [vmem:[%s8 + $0xc] sm:$0xf]
  %v774 = vld [vmem:[%s8 + $0x10] sm:$0xf]
  %v775 = vld [vmem:[%s8 + $0x14] sm:$0xf]
  %v776 = vld [vmem:[%s8 + $0x18] sm:$0xf]
  %v777 = vld [vmem:[%s8 + $0x1c] sm:$0xf]
  %v778 = vlaneseq
  %v779 = vshrl.u32 %v778, 7
  %v780 = vsub.s32 3, %v779
  %v781 = vrot.slane %v211, %v780
  %v790 = vunpack.c.l.b16 %v770
  %v791 = vunpack.c.l.b16 %v771
  %v792 = vunpack.c.l.b16 %v772
  %v793 = vunpack.c.l.b16 %v773
  %v794 = vunpack.c.l.b16 %v774
  %v795 = vunpack.c.l.b16 %v775
  %v796 = vunpack.c.l.b16 %v776
  %v797 = vunpack.c.l.b16 %v777
  %v798 = vpack.c.b16 %v791, %v790
  %v799 = vpack.c.b16 %v793, %v792
  %v800 = vpack.c.b16 %v795, %v794
  %v801 = vpack.c.b16 %v797, %v796
  %vm806 = vcmask 523264
  %v808 = vsel %vm806, %v769, 0
  %810 = vmatprep.subr.bf16.mxu0 0
  %811 = vmatpush1.bf16.msra.mxu0 0
  %812 = vmatprep.subr.bf16.mxu0 0
  %813 = vmatpush1.bf16.msra.mxu0 0
  %814 = vmatprep.subr.bf16.mxu0 0
  %815 = vmatpush1.bf16.msra.mxu0 0
  %816 = vmatprep.subr.bf16.mxu0 0
  %817 = vmatpush1.bf16.msra.mxu0 0
  %818 = vmatprep.subr.bf16.mxu0 0
  %819 = vmatpush1.bf16.msra.mxu0 %v801
  %820 = vmatprep.subr.bf16.mxu0 0
  %821 = vmatpush1.bf16.msra.mxu0 %v800
  %822 = vmatprep.subr.bf16.mxu0 0
  %823 = vmatpush1.bf16.msra.mxu0 %v799
  %824 = vmatprep.subr.bf16.mxu0 0
  %825 = vmatpush1.bf16.msra.mxu0 %v798
  %826 = vmatprep.subr.bf16.mxu0 0
  %827 = vmatpush2.bf16.msra.mxu0 0
  %828 = vmatprep.subr.bf16.mxu0 0
  %829 = vmatpush2.bf16.msra.mxu0 0
  %830 = vmatprep.subr.bf16.mxu0 0
  %831 = vmatpush2.bf16.msra.mxu0 0
  %832 = vmatprep.subr.bf16.mxu0 0
  %833 = vmatpush2.bf16.msra.mxu0 0
  %834 = vmatprep.subr.bf16.mxu0 0
  %835 = vmatpush2.bf16.msra.mxu0 0
  %836 = vmatprep.subr.bf16.mxu0 0
  %837 = vmatpush2.bf16.msra.mxu0 0
  %838 = vmatprep.subr.bf16.mxu0 0
  %839 = vmatpush2.bf16.msra.mxu0 0
  %840 = vmatprep.subr.bf16.mxu0 0
  %841 = vmatpush2.bf16.msra.mxu0 0
  %842 = vmatprep.mubr.bf16.mxu0 0
  %843 = vmatmul.mubr.bf16.gmra.mxu0 %v808
  %v844 = vpop.f32.mrf.mxu0
  %v845 = vadd.f32 %v781, %v844
  %v846 = vpop.f32.mrf.mxu0
  %v847 = vpop.f32.mrf.mxu0
  %v848 = vadd.f32 %v781, %v847
  %v849 = vpop.f32.mrf.mxu0
  %850 = vdwg.mxu0
  %v851 = vadd.f32 %v684, %v845
  %v852 = vadd.f32 %v685, %v848
  %v853 = vsel %vm163, %v851, 0.0
  %854 = vadd.xlane.f32.xlu0 %v853
  %v855 = vpop.xlane.xlu0 %854
  %v856 = vsel %vm163, %v852, 0.0
  %857 = vadd.xlane.f32.xlu0 %v856
  %v858 = vpop.xlane.xlu0 %857
  %v859 = vmul.f32 %v855, %v170
  %v860 = vmul.f32 %v858, %v170
  %v861 = vmul.f32 %v851, %v851
  %v862 = vmul.f32 %v852, %v852
  %v863 = vsel %vm163, %v861, 0.0
  %864 = vadd.xlane.f32.xlu0 %v863
  %v865 = vpop.xlane.xlu0 %864
  %v866 = vsel %vm163, %v862, 0.0
  %867 = vadd.xlane.f32.xlu0 %v866
  %v868 = vpop.xlane.xlu0 %867
  %v869 = vmul.f32 %v865, %v170
  %v870 = vmul.f32 %v868, %v170
  %v871 = vmul.f32 %v859, %v859
  %v872 = vmul.f32 %v860, %v860
  %v873 = vsub.f32 %v869, %v871
  %v874 = vsub.f32 %v870, %v872
  %v875 = vmax.f32 %v873, 0.0
  %v876 = vmax.f32 %v874, 0.0
  %v877 = vsub.f32 %v851, %v859
  %v878 = vsub.f32 %v852, %v860
  %v879 = vadd.f32 %v875, 1e-12
  %v880 = vadd.f32 %v876, 1e-12
  %v881 = vrsqrt.pop %v879
  %v882 = vrsqrt.pop %v880
  %v883 = vmul.f32 %v877, %v881
  %v884 = vmul.f32 %v878, %v882
  %v885 = vlaneseq
  %v886 = vshrl.u32 %v885, 7
  %v887 = vsub.s32 6, %v886
  %v888 = vrot.slane %v211, %v887
  %v889 = vmul.f32 %v883, %v888
  %v890 = vmul.f32 %v884, %v888
  %v891 = vlaneseq
  %v892 = vshrl.u32 %v891, 7
  %v893 = vsub.s32 7, %v892
  %v894 = vrot.slane %v211, %v893
  %v895 = vadd.f32 %v889, %v894
  %v896 = vadd.f32 %v890, %v894
  %s897 = scalar_lea.vmem %s9, 8
  %v898 = vld [vmem:[%s897] sm:$0xff]
  %v899 = vpack.c.bf16 %v896, %v895
  %s900 = scalar_lea.vmem %s5, 16
  %v901 = vld [vmem:[%s900] sm:$0xf]
  %v902 = vld [vmem:[%s900 + $0x4] sm:$0xf]
  %v903 = vld [vmem:[%s900 + $0x8] sm:$0xf]
  %v904 = vld [vmem:[%s900 + $0xc] sm:$0xf]
  %v905 = vlaneseq
  %v906 = vshrl.u32 %v905, 7
  %v907 = vsub.s32 0, %v906
  %v908 = vrot.slane %v898, %v907
  %v913 = vunpack.c.l.b16 %v901
  %v914 = vunpack.c.l.b16 %v902
  %v915 = vunpack.c.l.b16 %v903
  %v916 = vunpack.c.l.b16 %v904
  %v917 = vpack.c.b16 %v914, %v913
  %v918 = vpack.c.b16 %v916, %v915
  %v922 = vsel %vm163, %v899, 0
  %924 = vmatprep.subr.bf16.mxu0 0
  %925 = vmatpush1.bf16.msra.mxu0 0
  %926 = vmatprep.subr.bf16.mxu0 0
  %927 = vmatpush1.bf16.msra.mxu0 0
  %928 = vmatprep.subr.bf16.mxu0 0
  %929 = vmatpush1.bf16.msra.mxu0 0
  %930 = vmatprep.subr.bf16.mxu0 0
  %931 = vmatpush1.bf16.msra.mxu0 0
  %932 = vmatprep.subr.bf16.mxu0 0
  %933 = vmatpush1.bf16.msra.mxu0 0
  %934 = vmatprep.subr.bf16.mxu0 0
  %935 = vmatpush1.bf16.msra.mxu0 0
  %936 = vmatprep.subr.bf16.mxu0 0
  %937 = vmatpush1.bf16.msra.mxu0 %v918
  %938 = vmatprep.subr.bf16.mxu0 0
  %939 = vmatpush1.bf16.msra.mxu0 %v917
  %940 = vmatprep.subr.bf16.mxu0 0
  %941 = vmatpush2.bf16.msra.mxu0 0
  %942 = vmatprep.subr.bf16.mxu0 0
  %943 = vmatpush2.bf16.msra.mxu0 0
  %944 = vmatprep.subr.bf16.mxu0 0
  %945 = vmatpush2.bf16.msra.mxu0 0
  %946 = vmatprep.subr.bf16.mxu0 0
  %947 = vmatpush2.bf16.msra.mxu0 0
  %948 = vmatprep.subr.bf16.mxu0 0
  %949 = vmatpush2.bf16.msra.mxu0 0
  %950 = vmatprep.subr.bf16.mxu0 0
  %951 = vmatpush2.bf16.msra.mxu0 0
  %952 = vmatprep.subr.bf16.mxu0 0
  %953 = vmatpush2.bf16.msra.mxu0 0
  %954 = vmatprep.subr.bf16.mxu0 0
  %955 = vmatpush2.bf16.msra.mxu0 0
  %956 = vmatprep.mubr.bf16.mxu0 0
  %957 = vmatmul.mubr.bf16.gmra.mxu0 %v922
  %v958 = vpop.f32.mrf.mxu0
  %v959 = vadd.f32 %v908, %v958
  %v960 = vpop.f32.mrf.mxu0
  %v961 = vpop.f32.mrf.mxu0
  %v962 = vadd.f32 %v908, %v961
  %v963 = vpop.f32.mrf.mxu0
  %964 = vdwg.mxu0
  %v965 = vpack.c.bf16 %v962, %v959
  %967 = vrot.lane.b32.xlu0 %v965, 96
  %v968 = vpop.permute.xlu0 %967
  %v970 = vsel %vm281, %v965, 0
  %v973 = vsel %vm281, %v968, 0
  %975 = vmatprep.subr.bf16.mxu0 0
  %976 = vmatpush1.bf16.xpose.msra.mxu0 0
  %977 = vmatprep.subr.bf16.mxu0 0
  %978 = vmatpush1.bf16.xpose.msra.mxu0 0
  %979 = vmatprep.subr.bf16.mxu0 0
  %980 = vmatpush1.bf16.xpose.msra.mxu0 0
  %981 = vmatprep.subr.bf16.mxu0 0
  %982 = vmatpush1.bf16.xpose.msra.mxu0 0
  %983 = vmatprep.subr.bf16.mxu0 0
  %984 = vmatpush1.bf16.xpose.msra.mxu0 0
  %985 = vmatprep.subr.bf16.mxu0 0
  %986 = vmatpush1.bf16.xpose.msra.mxu0 0
  %987 = vmatprep.subr.bf16.mxu0 0
  %988 = vmatpush1.bf16.xpose.msra.mxu0 0
  %989 = vmatprep.subr.bf16.mxu0 0
  %990 = vmatpush1.bf16.xpose.msra.mxu0 %v973
  %991 = vmatprep.subr.bf16.mxu0 0
  %992 = vmatpush2.bf16.xpose.msra.mxu0 0
  %993 = vmatprep.subr.bf16.mxu0 0
  %994 = vmatpush2.bf16.xpose.msra.mxu0 0
  %995 = vmatprep.subr.bf16.mxu0 0
  %996 = vmatpush2.bf16.xpose.msra.mxu0 0
  %997 = vmatprep.subr.bf16.mxu0 0
  %998 = vmatpush2.bf16.xpose.msra.mxu0 0
  %999 = vmatprep.subr.bf16.mxu0 0
  %1000 = vmatpush2.bf16.xpose.msra.mxu0 0
  %1001 = vmatprep.subr.bf16.mxu0 0
  %1002 = vmatpush2.bf16.xpose.msra.mxu0 0
  %1003 = vmatprep.subr.bf16.mxu0 0
  %1004 = vmatpush2.bf16.xpose.msra.mxu0 0
  %1005 = vmatprep.subr.bf16.mxu0 0
  %1006 = vmatpush2.bf16.xpose.msra.mxu0 0
  %1007 = vmatprep.mubr.bf16.mxu0 0
  %1008 = vmatmul.mubr.bf16.gmra.mxu0 %v970
  %v1009 = vpop.f32.mrf.mxu0
  %v1010 = vadd.f32 0.0, %v1009
  %v1011 = vpop.f32.mrf.mxu0
  %v1012 = vpop.f32.mrf.mxu0
  %v1013 = vadd.f32 0.0, %v1012
  %v1014 = vpop.f32.mrf.mxu0
  %1015 = vdwg.mxu0
  %v1016 = vmul.f32 %v1010, 0.25
  %v1017 = vmul.f32 %v1013, 0.25
  %v1018 = vadd.f32 %v1016, %v209
  %v1019 = vadd.f32 %v1017, %v210
  %v1020 = vsel %vm281, %v1018, -inf
  %1021 = vmax.xlane.f32.xlu0 %v1020
  %v1022 = vpop.xlane.xlu0 %1021
  %v1023 = vsel %vm281, %v1019, -inf
  %1024 = vmax.xlane.f32.xlu0 %v1023
  %v1025 = vpop.xlane.xlu0 %1024
  %v1026 = vsub.f32 %v1018, %v1022
  %v1027 = vsub.f32 %v1019, %v1025
  %v1028 = vmul.f32 %v1026, 1.442695
  %v1029 = vpow.pop %v1028
  %v1030 = vmul.f32 %v1027, 1.442695
  %v1031 = vpow.pop %v1030
  %v1032 = vsel %vm281, %v1029, 0.0
  %1033 = vadd.xlane.f32.xlu0 %v1032
  %v1034 = vpop.xlane.xlu0 %1033
  %v1035 = vsel %vm281, %v1031, 0.0
  %1036 = vadd.xlane.f32.xlu0 %v1035
  %v1037 = vpop.xlane.xlu0 %1036
  %v1038 = vrcp.pop %v1034
  %v1039 = vrcp.pop %v1037
  %v1040 = vmul.f32 %v1029, %v1038
  %v1041 = vmul.f32 %v1031, %v1039
  %v1042 = vpack.c.bf16 %v1041, %v1040
  %1043 = vrot.lane.b32.xlu0 %v965, 64
  %v1044 = vpop.permute.xlu0 %1043
  %v1047 = vsel %vm281, %v1042, 0
  %1049 = vmatprep.subr.bf16.mxu0 0
  %1050 = vmatpush1.bf16.msra.mxu0 0
  %1051 = vmatprep.subr.bf16.mxu0 0
  %1052 = vmatpush1.bf16.msra.mxu0 0
  %1053 = vmatprep.subr.bf16.mxu0 0
  %1054 = vmatpush1.bf16.msra.mxu0 0
  %1055 = vmatprep.subr.bf16.mxu0 0
  %1056 = vmatpush1.bf16.msra.mxu0 0
  %1057 = vmatprep.subr.bf16.mxu0 0
  %1058 = vmatpush1.bf16.msra.mxu0 0
  %1059 = vmatprep.subr.bf16.mxu0 0
  %1060 = vmatpush1.bf16.msra.mxu0 0
  %1061 = vmatprep.subr.bf16.mxu0 0
  %1062 = vmatpush1.bf16.msra.mxu0 0
  %1063 = vmatprep.subr.bf16.mxu0 0
  %1064 = vmatpush1.bf16.msra.mxu0 %v1044
  %1065 = vmatprep.subr.bf16.mxu0 0
  %1066 = vmatpush2.bf16.msra.mxu0 0
  %1067 = vmatprep.subr.bf16.mxu0 0
  %1068 = vmatpush2.bf16.msra.mxu0 0
  %1069 = vmatprep.subr.bf16.mxu0 0
  %1070 = vmatpush2.bf16.msra.mxu0 0
  %1071 = vmatprep.subr.bf16.mxu0 0
  %1072 = vmatpush2.bf16.msra.mxu0 0
  %1073 = vmatprep.subr.bf16.mxu0 0
  %1074 = vmatpush2.bf16.msra.mxu0 0
  %1075 = vmatprep.subr.bf16.mxu0 0
  %1076 = vmatpush2.bf16.msra.mxu0 0
  %1077 = vmatprep.subr.bf16.mxu0 0
  %1078 = vmatpush2.bf16.msra.mxu0 0
  %1079 = vmatprep.subr.bf16.mxu0 0
  %1080 = vmatpush2.bf16.msra.mxu0 0
  %1081 = vmatprep.mubr.bf16.mxu0 0
  %1082 = vmatmul.mubr.bf16.gmra.mxu0 %v1047
  %v1083 = vpop.f32.mrf.mxu0
  %v1084 = vadd.f32 0.0, %v1083
  %v1085 = vpop.f32.mrf.mxu0
  %v1086 = vpop.f32.mrf.mxu0
  %v1087 = vadd.f32 0.0, %v1086
  %v1088 = vpop.f32.mrf.mxu0
  %1089 = vdwg.mxu0
  %v1090 = vpack.c.bf16 %v1087, %v1084
  %s1091 = scalar_lea.vmem %s6, 16
  %v1092 = vld [vmem:[%s1091] sm:$0xf]
  %v1093 = vld [vmem:[%s1091 + $0x4] sm:$0xf]
  %1094 = vrot.lane.b32.xlu0 %v965, 112
  %v1095 = vpop.permute.xlu0 %1094
  %1096 = vrot.lane.b32.xlu0 %v965, 80
  %v1097 = vpop.permute.xlu0 %1096
  %v1099 = vsel %vm281, %v1095, 0
  %v1102 = vsel %vm281, %v1097, 0
  %1104 = vmatprep.subr.bf16.mxu0 0
  %1105 = vmatpush1.bf16.xpose.msra.mxu0 0
  %1106 = vmatprep.subr.bf16.mxu0 0
  %1107 = vmatpush1.bf16.xpose.msra.mxu0 0
  %1108 = vmatprep.subr.bf16.mxu0 0
  %1109 = vmatpush1.bf16.xpose.msra.mxu0 0
  %1110 = vmatprep.subr.bf16.mxu0 0
  %1111 = vmatpush1.bf16.xpose.msra.mxu0 0
  %1112 = vmatprep.subr.bf16.mxu0 0
  %1113 = vmatpush1.bf16.xpose.msra.mxu0 0
  %1114 = vmatprep.subr.bf16.mxu0 0
  %1115 = vmatpush1.bf16.xpose.msra.mxu0 0
  %1116 = vmatprep.subr.bf16.mxu0 0
  %1117 = vmatpush1.bf16.xpose.msra.mxu0 0
  %1118 = vmatprep.subr.bf16.mxu0 0
  %1119 = vmatpush1.bf16.xpose.msra.mxu0 %v1102
  %1120 = vmatprep.subr.bf16.mxu0 0
  %1121 = vmatpush2.bf16.xpose.msra.mxu0 0
  %1122 = vmatprep.subr.bf16.mxu0 0
  %1123 = vmatpush2.bf16.xpose.msra.mxu0 0
  %1124 = vmatprep.subr.bf16.mxu0 0
  %1125 = vmatpush2.bf16.xpose.msra.mxu0 0
  %1126 = vmatprep.subr.bf16.mxu0 0
  %1127 = vmatpush2.bf16.xpose.msra.mxu0 0
  %1128 = vmatprep.subr.bf16.mxu0 0
  %1129 = vmatpush2.bf16.xpose.msra.mxu0 0
  %1130 = vmatprep.subr.bf16.mxu0 0
  %1131 = vmatpush2.bf16.xpose.msra.mxu0 0
  %1132 = vmatprep.subr.bf16.mxu0 0
  %1133 = vmatpush2.bf16.xpose.msra.mxu0 0
  %1134 = vmatprep.subr.bf16.mxu0 0
  %1135 = vmatpush2.bf16.xpose.msra.mxu0 0
  %1136 = vmatprep.mubr.bf16.mxu0 0
  %1137 = vmatmul.mubr.bf16.gmra.mxu0 %v1099
  %v1138 = vpop.f32.mrf.mxu0
  %v1139 = vadd.f32 0.0, %v1138
  %v1140 = vpop.f32.mrf.mxu0
  %v1141 = vpop.f32.mrf.mxu0
  %v1142 = vadd.f32 0.0, %v1141
  %v1143 = vpop.f32.mrf.mxu0
  %1144 = vdwg.mxu0
  %v1145 = vmul.f32 %v1139, 0.25
  %v1146 = vmul.f32 %v1142, 0.25
  %v1147 = vadd.f32 %v1145, %v209
  %v1148 = vadd.f32 %v1146, %v210
  %v1149 = vsel %vm281, %v1147, -inf
  %1150 = vmax.xlane.f32.xlu0 %v1149
  %v1151 = vpop.xlane.xlu0 %1150
  %v1152 = vsel %vm281, %v1148, -inf
  %1153 = vmax.xlane.f32.xlu0 %v1152
  %v1154 = vpop.xlane.xlu0 %1153
  %v1155 = vsub.f32 %v1147, %v1151
  %v1156 = vsub.f32 %v1148, %v1154
  %v1157 = vmul.f32 %v1155, 1.442695
  %v1158 = vpow.pop %v1157
  %v1159 = vmul.f32 %v1156, 1.442695
  %v1160 = vpow.pop %v1159
  %v1161 = vsel %vm281, %v1158, 0.0
  %1162 = vadd.xlane.f32.xlu0 %v1161
  %v1163 = vpop.xlane.xlu0 %1162
  %v1164 = vsel %vm281, %v1160, 0.0
  %1165 = vadd.xlane.f32.xlu0 %v1164
  %v1166 = vpop.xlane.xlu0 %1165
  %v1167 = vrcp.pop %v1163
  %v1168 = vrcp.pop %v1166
  %v1169 = vmul.f32 %v1158, %v1167
  %v1170 = vmul.f32 %v1160, %v1168
  %v1171 = vpack.c.bf16 %v1170, %v1169
  %1172 = vrot.lane.b32.xlu0 %v965, 48
  %v1173 = vpop.permute.xlu0 %1172
  %v1176 = vsel %vm281, %v1171, 0
  %1178 = vmatprep.subr.bf16.mxu0 0
  %1179 = vmatpush1.bf16.msra.mxu0 0
  %1180 = vmatprep.subr.bf16.mxu0 0
  %1181 = vmatpush1.bf16.msra.mxu0 0
  %1182 = vmatprep.subr.bf16.mxu0 0
  %1183 = vmatpush1.bf16.msra.mxu0 0
  %1184 = vmatprep.subr.bf16.mxu0 0
  %1185 = vmatpush1.bf16.msra.mxu0 0
  %1186 = vmatprep.subr.bf16.mxu0 0
  %1187 = vmatpush1.bf16.msra.mxu0 0
  %1188 = vmatprep.subr.bf16.mxu0 0
  %1189 = vmatpush1.bf16.msra.mxu0 0
  %1190 = vmatprep.subr.bf16.mxu0 0
  %1191 = vmatpush1.bf16.msra.mxu0 0
  %1192 = vmatprep.subr.bf16.mxu0 0
  %1193 = vmatpush1.bf16.msra.mxu0 %v1173
  %1194 = vmatprep.subr.bf16.mxu0 0
  %1195 = vmatpush2.bf16.msra.mxu0 0
  %1196 = vmatprep.subr.bf16.mxu0 0
  %1197 = vmatpush2.bf16.msra.mxu0 0
  %1198 = vmatprep.subr.bf16.mxu0 0
  %1199 = vmatpush2.bf16.msra.mxu0 0
  %1200 = vmatprep.subr.bf16.mxu0 0
  %1201 = vmatpush2.bf16.msra.mxu0 0
  %1202 = vmatprep.subr.bf16.mxu0 0
  %1203 = vmatpush2.bf16.msra.mxu0 0
  %1204 = vmatprep.subr.bf16.mxu0 0
  %1205 = vmatpush2.bf16.msra.mxu0 0
  %1206 = vmatprep.subr.bf16.mxu0 0
  %1207 = vmatpush2.bf16.msra.mxu0 0
  %1208 = vmatprep.subr.bf16.mxu0 0
  %1209 = vmatpush2.bf16.msra.mxu0 0
  %1210 = vmatprep.mubr.bf16.mxu0 0
  %1211 = vmatmul.mubr.bf16.gmra.mxu0 %v1176
  %v1212 = vpop.f32.mrf.mxu0
  %v1213 = vadd.f32 0.0, %v1212
  %v1214 = vpop.f32.mrf.mxu0
  %v1215 = vpop.f32.mrf.mxu0
  %v1216 = vadd.f32 0.0, %v1215
  %v1217 = vpop.f32.mrf.mxu0
  %1218 = vdwg.mxu0
  %v1219 = vpack.c.bf16 %v1216, %v1213
  %v1220 = vld [vmem:[%s1091 + $0x8] sm:$0xf]
  %v1221 = vld [vmem:[%s1091 + $0xc] sm:$0xf]
  %v1224 = vunpack.c.l.b16 %v1220
  %v1225 = vunpack.c.l.b16 %v1221
  %v1226 = vpack.c.b16 %v1225, %v1224
  %v1229 = vsel %vm281, %v1219, 0
  %1231 = vmatprep.subr.bf16.mxu0 0
  %1232 = vmatpush1.bf16.msra.mxu0 0
  %1233 = vmatprep.subr.bf16.mxu0 0
  %1234 = vmatpush1.bf16.msra.mxu0 0
  %1235 = vmatprep.subr.bf16.mxu0 0
  %1236 = vmatpush1.bf16.msra.mxu0 0
  %1237 = vmatprep.subr.bf16.mxu0 0
  %1238 = vmatpush1.bf16.msra.mxu0 0
  %1239 = vmatprep.subr.bf16.mxu0 0
  %1240 = vmatpush1.bf16.msra.mxu0 0
  %1241 = vmatprep.subr.bf16.mxu0 0
  %1242 = vmatpush1.bf16.msra.mxu0 0
  %1243 = vmatprep.subr.bf16.mxu0 0
  %1244 = vmatpush1.bf16.msra.mxu0 0
  %1245 = vmatprep.subr.bf16.mxu0 0
  %1246 = vmatpush1.bf16.msra.mxu0 %v1226
  %1247 = vmatprep.subr.bf16.mxu0 0
  %1248 = vmatpush2.bf16.msra.mxu0 0
  %1249 = vmatprep.subr.bf16.mxu0 0
  %1250 = vmatpush2.bf16.msra.mxu0 0
  %1251 = vmatprep.subr.bf16.mxu0 0
  %1252 = vmatpush2.bf16.msra.mxu0 0
  %1253 = vmatprep.subr.bf16.mxu0 0
  %1254 = vmatpush2.bf16.msra.mxu0 0
  %1255 = vmatprep.subr.bf16.mxu0 0
  %1256 = vmatpush2.bf16.msra.mxu0 0
  %1257 = vmatprep.subr.bf16.mxu0 0
  %1258 = vmatpush2.bf16.msra.mxu0 0
  %1259 = vmatprep.subr.bf16.mxu0 0
  %1260 = vmatpush2.bf16.msra.mxu0 0
  %1261 = vmatprep.subr.bf16.mxu0 0
  %1262 = vmatpush2.bf16.msra.mxu0 0
  %1263 = vmatprep.mubr.bf16.mxu0 0
  %1264 = vmatmul.mubr.bf16.gmra.mxu0 %v1229
  %v1265 = vpop.f32.mrf.mxu0
  %v1266 = vadd.f32 0.0, %v1265
  %v1267 = vpop.f32.mrf.mxu0
  %v1268 = vpop.f32.mrf.mxu0
  %v1269 = vadd.f32 0.0, %v1268
  %v1270 = vpop.f32.mrf.mxu0
  %1271 = vdwg.mxu0
  %v1274 = vunpack.c.l.b16 %v1092
  %v1275 = vunpack.c.l.b16 %v1093
  %v1276 = vpack.c.b16 %v1275, %v1274
  %v1279 = vsel %vm281, %v1090, 0
  %1281 = vmatprep.subr.bf16.mxu0 0
  %1282 = vmatpush1.bf16.msra.mxu0 0
  %1283 = vmatprep.subr.bf16.mxu0 0
  %1284 = vmatpush1.bf16.msra.mxu0 0
  %1285 = vmatprep.subr.bf16.mxu0 0
  %1286 = vmatpush1.bf16.msra.mxu0 0
  %1287 = vmatprep.subr.bf16.mxu0 0
  %1288 = vmatpush1.bf16.msra.mxu0 0
  %1289 = vmatprep.subr.bf16.mxu0 0
  %1290 = vmatpush1.bf16.msra.mxu0 0
  %1291 = vmatprep.subr.bf16.mxu0 0
  %1292 = vmatpush1.bf16.msra.mxu0 0
  %1293 = vmatprep.subr.bf16.mxu0 0
  %1294 = vmatpush1.bf16.msra.mxu0 0
  %1295 = vmatprep.subr.bf16.mxu0 0
  %1296 = vmatpush1.bf16.msra.mxu0 %v1276
  %1297 = vmatprep.subr.bf16.mxu0 0
  %1298 = vmatpush2.bf16.msra.mxu0 0
  %1299 = vmatprep.subr.bf16.mxu0 0
  %1300 = vmatpush2.bf16.msra.mxu0 0
  %1301 = vmatprep.subr.bf16.mxu0 0
  %1302 = vmatpush2.bf16.msra.mxu0 0
  %1303 = vmatprep.subr.bf16.mxu0 0
  %1304 = vmatpush2.bf16.msra.mxu0 0
  %1305 = vmatprep.subr.bf16.mxu0 0
  %1306 = vmatpush2.bf16.msra.mxu0 0
  %1307 = vmatprep.subr.bf16.mxu0 0
  %1308 = vmatpush2.bf16.msra.mxu0 0
  %1309 = vmatprep.subr.bf16.mxu0 0
  %1310 = vmatpush2.bf16.msra.mxu0 0
  %1311 = vmatprep.subr.bf16.mxu0 0
  %1312 = vmatpush2.bf16.msra.mxu0 0
  %1313 = vmatprep.mubr.bf16.mxu0 0
  %1314 = vmatmul.mubr.bf16.gmra.mxu0 %v1279
  %v1315 = vpop.f32.mrf.mxu0
  %v1316 = vadd.f32 %v1266, %v1315
  %v1317 = vpop.f32.mrf.mxu0
  %v1318 = vpop.f32.mrf.mxu0
  %v1319 = vadd.f32 %v1269, %v1318
  %v1320 = vpop.f32.mrf.mxu0
  %1321 = vdwg.mxu0
  %v1322 = vadd.f32 %v895, %v1316
  %v1323 = vadd.f32 %v896, %v1319
  %v1324 = vlaneseq
  %v1325 = vshrl.u32 %v1324, 7
  %v1326 = vsub.s32 1, %v1325
  %v1327 = vrot.slane %v898, %v1326
  %v1328 = vadd.f32 %v1322, %v1327
  %v1329 = vadd.f32 %v1323, %v1327
  %v1330 = vsel %vm163, %v1328, 0.0
  %1331 = vadd.xlane.f32.xlu0 %v1330
  %v1332 = vpop.xlane.xlu0 %1331
  %v1333 = vsel %vm163, %v1329, 0.0
  %1334 = vadd.xlane.f32.xlu0 %v1333
  %v1335 = vpop.xlane.xlu0 %1334
  %v1336 = vmul.f32 %v1332, %v170
  %v1337 = vmul.f32 %v1335, %v170
  %v1338 = vmul.f32 %v1328, %v1328
  %v1339 = vmul.f32 %v1329, %v1329
  %v1340 = vsel %vm163, %v1338, 0.0
  %1341 = vadd.xlane.f32.xlu0 %v1340
  %v1342 = vpop.xlane.xlu0 %1341
  %v1343 = vsel %vm163, %v1339, 0.0
  %1344 = vadd.xlane.f32.xlu0 %v1343
  %v1345 = vpop.xlane.xlu0 %1344
  %v1346 = vmul.f32 %v1342, %v170
  %v1347 = vmul.f32 %v1345, %v170
  %v1348 = vmul.f32 %v1336, %v1336
  %v1349 = vmul.f32 %v1337, %v1337
  %v1350 = vsub.f32 %v1346, %v1348
  %v1351 = vsub.f32 %v1347, %v1349
  %v1352 = vmax.f32 %v1350, 0.0
  %v1353 = vmax.f32 %v1351, 0.0
  %v1354 = vsub.f32 %v1328, %v1336
  %v1355 = vsub.f32 %v1329, %v1337
  %v1356 = vadd.f32 %v1352, 1e-12
  %v1357 = vadd.f32 %v1353, 1e-12
  %v1358 = vrsqrt.pop %v1356
  %v1359 = vrsqrt.pop %v1357
  %v1360 = vmul.f32 %v1354, %v1358
  %v1361 = vmul.f32 %v1355, %v1359
  %v1362 = vlaneseq
  %v1363 = vshrl.u32 %v1362, 7
  %v1364 = vsub.s32 4, %v1363
  %v1365 = vrot.slane %v898, %v1364
  %v1366 = vmul.f32 %v1360, %v1365
  %v1367 = vmul.f32 %v1361, %v1365
  %v1368 = vlaneseq
  %v1369 = vshrl.u32 %v1368, 7
  %v1370 = vsub.s32 5, %v1369
  %v1371 = vrot.slane %v898, %v1370
  %v1372 = vadd.f32 %v1366, %v1371
  %v1373 = vadd.f32 %v1367, %v1371
  %v1374 = vpack.c.bf16 %v1373, %v1372
  %s1375 = scalar_lea.vmem %s7, 16
  %v1376 = vld [vmem:[%s1375] sm:$0xf]
  %v1377 = vld [vmem:[%s1375 + $0x4] sm:$0xf]
  %v1378 = vld [vmem:[%s1375 + $0x8] sm:$0xf]
  %v1379 = vld [vmem:[%s1375 + $0xc] sm:$0xf]
  %v1380 = vlaneseq
  %v1381 = vshrl.u32 %v1380, 7
  %v1382 = vsub.s32 2, %v1381
  %v1383 = vrot.slane %v898, %v1382
  %v1388 = vunpack.c.l.b16 %v1376
  %v1389 = vunpack.c.l.b16 %v1377
  %v1390 = vunpack.c.l.b16 %v1378
  %v1391 = vunpack.c.l.b16 %v1379
  %v1392 = vpack.c.b16 %v1389, %v1388
  %v1393 = vpack.c.b16 %v1391, %v1390
  %v1397 = vsel %vm163, %v1374, 0
  %1399 = vmatprep.subr.bf16.mxu0 0
  %1400 = vmatpush1.bf16.msra.mxu0 0
  %1401 = vmatprep.subr.bf16.mxu0 0
  %1402 = vmatpush1.bf16.msra.mxu0 0
  %1403 = vmatprep.subr.bf16.mxu0 0
  %1404 = vmatpush1.bf16.msra.mxu0 0
  %1405 = vmatprep.subr.bf16.mxu0 0
  %1406 = vmatpush1.bf16.msra.mxu0 0
  %1407 = vmatprep.subr.bf16.mxu0 0
  %1408 = vmatpush1.bf16.msra.mxu0 0
  %1409 = vmatprep.subr.bf16.mxu0 0
  %1410 = vmatpush1.bf16.msra.mxu0 0
  %1411 = vmatprep.subr.bf16.mxu0 0
  %1412 = vmatpush1.bf16.msra.mxu0 %v1393
  %1413 = vmatprep.subr.bf16.mxu0 0
  %1414 = vmatpush1.bf16.msra.mxu0 %v1392
  %1415 = vmatprep.subr.bf16.mxu0 0
  %1416 = vmatpush2.bf16.msra.mxu0 0
  %1417 = vmatprep.subr.bf16.mxu0 0
  %1418 = vmatpush2.bf16.msra.mxu0 0
  %1419 = vmatprep.subr.bf16.mxu0 0
  %1420 = vmatpush2.bf16.msra.mxu0 0
  %1421 = vmatprep.subr.bf16.mxu0 0
  %1422 = vmatpush2.bf16.msra.mxu0 0
  %1423 = vmatprep.subr.bf16.mxu0 0
  %1424 = vmatpush2.bf16.msra.mxu0 0
  %1425 = vmatprep.subr.bf16.mxu0 0
  %1426 = vmatpush2.bf16.msra.mxu0 0
  %1427 = vmatprep.subr.bf16.mxu0 0
  %1428 = vmatpush2.bf16.msra.mxu0 0
  %1429 = vmatprep.subr.bf16.mxu0 0
  %1430 = vmatpush2.bf16.msra.mxu0 0
  %1431 = vmatprep.mubr.bf16.mxu0 0
  %1432 = vmatmul.mubr.bf16.gmra.mxu0 %v1397
  %v1433 = vpop.f32.mrf.mxu0
  %v1434 = vadd.f32 %v1383, %v1433
  %v1435 = vpop.f32.mrf.mxu0
  %v1436 = vpop.f32.mrf.mxu0
  %v1437 = vadd.f32 %v1383, %v1436
  %v1438 = vpop.f32.mrf.mxu0
  %1439 = vdwg.mxu0
  %v1440 = vmul.f32 %v1434, %v1434
  %v1441 = vmul.f32 %v1437, %v1437
  %v1442 = vmul.f32 %v1434, %v1440
  %v1443 = vmul.f32 %v1437, %v1441
  %v1444 = vmul.f32 %v1442, 0.044715
  %v1445 = vmul.f32 %v1443, 0.044715
  %v1446 = vadd.f32 %v1434, %v1444
  %v1447 = vadd.f32 %v1437, %v1445
  %v1448 = vmul.f32 %v1446, 0.7978846
  %v1449 = vmul.f32 %v1447, 0.7978846
  %v1450 = vtanh.pop %v1448
  %v1451 = vtanh.pop %v1449
  %v1452 = vadd.f32 %v1450, 1.0
  %v1453 = vadd.f32 %v1451, 1.0
  %v1454 = vmul.f32 %v1452, 0.5
  %v1455 = vmul.f32 %v1453, 0.5
  %v1456 = vmul.f32 %v1434, %v1454
  %v1457 = vmul.f32 %v1437, %v1455
  %v1458 = vpack.c.bf16 %v1457, %v1456
  %s1459 = scalar_lea.vmem %s8, 32
  %v1460 = vld [vmem:[%s1459] sm:$0xf]
  %v1461 = vld [vmem:[%s1459 + $0x4] sm:$0xf]
  %v1462 = vld [vmem:[%s1459 + $0x8] sm:$0xf]
  %v1463 = vld [vmem:[%s1459 + $0xc] sm:$0xf]
  %v1464 = vld [vmem:[%s1459 + $0x10] sm:$0xf]
  %v1465 = vld [vmem:[%s1459 + $0x14] sm:$0xf]
  %v1466 = vld [vmem:[%s1459 + $0x18] sm:$0xf]
  %v1467 = vld [vmem:[%s1459 + $0x1c] sm:$0xf]
  %v1468 = vlaneseq
  %v1469 = vshrl.u32 %v1468, 7
  %v1470 = vsub.s32 3, %v1469
  %v1471 = vrot.slane %v898, %v1470
  %v1480 = vunpack.c.l.b16 %v1460
  %v1481 = vunpack.c.l.b16 %v1461
  %v1482 = vunpack.c.l.b16 %v1462
  %v1483 = vunpack.c.l.b16 %v1463
  %v1484 = vunpack.c.l.b16 %v1464
  %v1485 = vunpack.c.l.b16 %v1465
  %v1486 = vunpack.c.l.b16 %v1466
  %v1487 = vunpack.c.l.b16 %v1467
  %v1488 = vpack.c.b16 %v1481, %v1480
  %v1489 = vpack.c.b16 %v1483, %v1482
  %v1490 = vpack.c.b16 %v1485, %v1484
  %v1491 = vpack.c.b16 %v1487, %v1486
  %v1497 = vsel %vm806, %v1458, 0
  %1499 = vmatprep.subr.bf16.mxu0 0
  %1500 = vmatpush1.bf16.msra.mxu0 0
  %1501 = vmatprep.subr.bf16.mxu0 0
  %1502 = vmatpush1.bf16.msra.mxu0 0
  %1503 = vmatprep.subr.bf16.mxu0 0
  %1504 = vmatpush1.bf16.msra.mxu0 0
  %1505 = vmatprep.subr.bf16.mxu0 0
  %1506 = vmatpush1.bf16.msra.mxu0 0
  %1507 = vmatprep.subr.bf16.mxu0 0
  %1508 = vmatpush1.bf16.msra.mxu0 %v1491
  %1509 = vmatprep.subr.bf16.mxu0 0
  %1510 = vmatpush1.bf16.msra.mxu0 %v1490
  %1511 = vmatprep.subr.bf16.mxu0 0
  %1512 = vmatpush1.bf16.msra.mxu0 %v1489
  %1513 = vmatprep.subr.bf16.mxu0 0
  %1514 = vmatpush1.bf16.msra.mxu0 %v1488
  %1515 = vmatprep.subr.bf16.mxu0 0
  %1516 = vmatpush2.bf16.msra.mxu0 0
  %1517 = vmatprep.subr.bf16.mxu0 0
  %1518 = vmatpush2.bf16.msra.mxu0 0
  %1519 = vmatprep.subr.bf16.mxu0 0
  %1520 = vmatpush2.bf16.msra.mxu0 0
  %1521 = vmatprep.subr.bf16.mxu0 0
  %1522 = vmatpush2.bf16.msra.mxu0 0
  %1523 = vmatprep.subr.bf16.mxu0 0
  %1524 = vmatpush2.bf16.msra.mxu0 0
  %1525 = vmatprep.subr.bf16.mxu0 0
  %1526 = vmatpush2.bf16.msra.mxu0 0
  %1527 = vmatprep.subr.bf16.mxu0 0
  %1528 = vmatpush2.bf16.msra.mxu0 0
  %1529 = vmatprep.subr.bf16.mxu0 0
  %1530 = vmatpush2.bf16.msra.mxu0 0
  %1531 = vmatprep.mubr.bf16.mxu0 0
  %1532 = vmatmul.mubr.bf16.gmra.mxu0 %v1497
  %v1533 = vpop.f32.mrf.mxu0
  %v1534 = vadd.f32 %v1471, %v1533
  %v1535 = vpop.f32.mrf.mxu0
  %v1536 = vpop.f32.mrf.mxu0
  %v1537 = vadd.f32 %v1471, %v1536
  %v1538 = vpop.f32.mrf.mxu0
  %1539 = vdwg.mxu0
  %v1540 = vadd.f32 %v1372, %v1534
  %v1541 = vadd.f32 %v1373, %v1537
  %v1542 = vsel %vm163, %v1540, 0.0
  %1543 = vadd.xlane.f32.xlu0 %v1542
  %v1544 = vpop.xlane.xlu0 %1543
  %v1545 = vsel %vm163, %v1541, 0.0
  %1546 = vadd.xlane.f32.xlu0 %v1545
  %v1547 = vpop.xlane.xlu0 %1546
  %v1548 = vmul.f32 %v1544, %v170
  %v1549 = vmul.f32 %v1547, %v170
  %v1550 = vmul.f32 %v1540, %v1540
  %v1551 = vmul.f32 %v1541, %v1541
  %v1552 = vsel %vm163, %v1550, 0.0
  %1553 = vadd.xlane.f32.xlu0 %v1552
  %v1554 = vpop.xlane.xlu0 %1553
  %v1555 = vsel %vm163, %v1551, 0.0
  %1556 = vadd.xlane.f32.xlu0 %v1555
  %v1557 = vpop.xlane.xlu0 %1556
  %v1558 = vmul.f32 %v1554, %v170
  %v1559 = vmul.f32 %v1557, %v170
  %v1560 = vmul.f32 %v1548, %v1548
  %v1561 = vmul.f32 %v1549, %v1549
  %v1562 = vsub.f32 %v1558, %v1560
  %v1563 = vsub.f32 %v1559, %v1561
  %v1564 = vmax.f32 %v1562, 0.0
  %v1565 = vmax.f32 %v1563, 0.0
  %v1566 = vsub.f32 %v1540, %v1548
  %v1567 = vsub.f32 %v1541, %v1549
  %v1568 = vadd.f32 %v1564, 1e-12
  %v1569 = vadd.f32 %v1565, 1e-12
  %v1570 = vrsqrt.pop %v1568
  %v1571 = vrsqrt.pop %v1569
  %v1572 = vmul.f32 %v1566, %v1570
  %v1573 = vmul.f32 %v1567, %v1571
  %v1574 = vlaneseq
  %v1575 = vshrl.u32 %v1574, 7
  %v1576 = vsub.s32 6, %v1575
  %v1577 = vrot.slane %v898, %v1576
  %v1578 = vmul.f32 %v1572, %v1577
  %v1579 = vmul.f32 %v1573, %v1577
  %v1580 = vlaneseq
  %v1581 = vshrl.u32 %v1580, 7
  %v1582 = vsub.s32 7, %v1581
  %v1583 = vrot.slane %v898, %v1582
  %v1584 = vadd.f32 %v1578, %v1583
  %v1585 = vadd.f32 %v1579, %v1583
  %v1586 = vlaneseq
  %v1587 = vshrl.u32 %v1586, 7
  %v1588 = vmul.u32 %v1587, 8
  %vm1589 = vcmp.eq.s32.totalorder %v46, %v1588
  %v1590 = vsel %vm1589, 1, 0
  %v1591 = vcvt.s32.f32 %v1590
  %v1592 = vpack.c.bf16 %v1591, %v1591
  %v1593 = vpack.c.bf16 %v1585, %v1584
  %v1595 = vsel %vm281, %v1592, 0
  %1597 = vmatprep.subr.bf16.mxu0 0
  %1598 = vmatpush1.bf16.msra.mxu0 0
  %1599 = vmatprep.subr.bf16.mxu0 0
  %1600 = vmatpush1.bf16.msra.mxu0 0
  %1601 = vmatprep.subr.bf16.mxu0 0
  %1602 = vmatpush1.bf16.msra.mxu0 0
  %1603 = vmatprep.subr.bf16.mxu0 0
  %1604 = vmatpush1.bf16.msra.mxu0 0
  %1605 = vmatprep.subr.bf16.mxu0 0
  %1606 = vmatpush1.bf16.msra.mxu0 0
  %1607 = vmatprep.subr.bf16.mxu0 0
  %1608 = vmatpush1.bf16.msra.mxu0 0
  %1609 = vmatprep.subr.bf16.mxu0 0
  %1610 = vmatpush1.bf16.msra.mxu0 0
  %1611 = vmatprep.subr.bf16.mxu0 0
  %1612 = vmatpush1.bf16.msra.mxu0 %v1593
  %1613 = vmatprep.subr.bf16.mxu0 0
  %1614 = vmatpush2.bf16.msra.mxu0 0
  %1615 = vmatprep.subr.bf16.mxu0 0
  %1616 = vmatpush2.bf16.msra.mxu0 0
  %1617 = vmatprep.subr.bf16.mxu0 0
  %1618 = vmatpush2.bf16.msra.mxu0 0
  %1619 = vmatprep.subr.bf16.mxu0 0
  %1620 = vmatpush2.bf16.msra.mxu0 0
  %1621 = vmatprep.subr.bf16.mxu0 0
  %1622 = vmatpush2.bf16.msra.mxu0 0
  %1623 = vmatprep.subr.bf16.mxu0 0
  %1624 = vmatpush2.bf16.msra.mxu0 0
  %1625 = vmatprep.subr.bf16.mxu0 0
  %1626 = vmatpush2.bf16.msra.mxu0 0
  %1627 = vmatprep.subr.bf16.mxu0 0
  %1628 = vmatpush2.bf16.msra.mxu0 0
  %1629 = vmatprep.mubr.bf16.mxu0 0
  %1630 = vmatmul.mubr.bf16.gmra.mxu0 %v1595
  %v1631 = vpop.f32.mrf.mxu0
  %v1632 = vadd.f32 0.0, %v1631
  %v1633 = vpop.f32.mrf.mxu0
  %v1634 = vpop.f32.mrf.mxu0
  %v1635 = vpop.f32.mrf.mxu0
  %1636 = vdwg.mxu0
  %v1637 = vpack.c.bf16 %v1632, %v1632
  %v1638 = vld [vmem:[%s11] sm:$0xf]
  %v1639 = vld [vmem:[%s11 + $0x4] sm:$0xf]
  %v1640 = vld [vmem:[%s11 + $0x8] sm:$0xf]
  %v1641 = vld [vmem:[%s11 + $0xc] sm:$0xf]
  %v1642 = vlaneseq
  %v1643 = vshrl.u32 %v1642, 7
  %v1644 = vsub.s32 2, %v1643
  %v1645 = vrot.slane %v42, %v1644
  %v1650 = vunpack.c.l.b16 %v1638
  %v1651 = vunpack.c.l.b16 %v1639
  %v1652 = vunpack.c.l.b16 %v1640
  %v1653 = vunpack.c.l.b16 %v1641
  %v1654 = vpack.c.b16 %v1651, %v1650
  %v1655 = vpack.c.b16 %v1653, %v1652
  %v1659 = vsel %vm163, %v1637, 0
  %1661 = vmatprep.subr.bf16.mxu0 0
  %1662 = vmatpush1.bf16.msra.mxu0 0
  %1663 = vmatprep.subr.bf16.mxu0 0
  %1664 = vmatpush1.bf16.msra.mxu0 0
  %1665 = vmatprep.subr.bf16.mxu0 0
  %1666 = vmatpush1.bf16.msra.mxu0 0
  %1667 = vmatprep.subr.bf16.mxu0 0
  %1668 = vmatpush1.bf16.msra.mxu0 0
  %1669 = vmatprep.subr.bf16.mxu0 0
  %1670 = vmatpush1.bf16.msra.mxu0 0
  %1671 = vmatprep.subr.bf16.mxu0 0
  %1672 = vmatpush1.bf16.msra.mxu0 0
  %1673 = vmatprep.subr.bf16.mxu0 0
  %1674 = vmatpush1.bf16.msra.mxu0 %v1655
  %1675 = vmatprep.subr.bf16.mxu0 0
  %1676 = vmatpush1.bf16.msra.mxu0 %v1654
  %1677 = vmatprep.subr.bf16.mxu0 0
  %1678 = vmatpush2.bf16.msra.mxu0 0
  %1679 = vmatprep.subr.bf16.mxu0 0
  %1680 = vmatpush2.bf16.msra.mxu0 0
  %1681 = vmatprep.subr.bf16.mxu0 0
  %1682 = vmatpush2.bf16.msra.mxu0 0
  %1683 = vmatprep.subr.bf16.mxu0 0
  %1684 = vmatpush2.bf16.msra.mxu0 0
  %1685 = vmatprep.subr.bf16.mxu0 0
  %1686 = vmatpush2.bf16.msra.mxu0 0
  %1687 = vmatprep.subr.bf16.mxu0 0
  %1688 = vmatpush2.bf16.msra.mxu0 0
  %1689 = vmatprep.subr.bf16.mxu0 0
  %1690 = vmatpush2.bf16.msra.mxu0 0
  %1691 = vmatprep.subr.bf16.mxu0 0
  %1692 = vmatpush2.bf16.msra.mxu0 0
  %1693 = vmatprep.mubr.bf16.mxu0 0
  %1694 = vmatmul.mubr.bf16.gmra.mxu0 %v1659
  %v1695 = vpop.f32.mrf.mxu0
  %v1696 = vadd.f32 %v1645, %v1695
  %v1697 = vpop.f32.mrf.mxu0
  %v1698 = vpop.f32.mrf.mxu0
  %v1699 = vpop.f32.mrf.mxu0
  %1700 = vdwg.mxu0
  %v1701 = vtanh.pop %v1696
  %v1702 = vpack.c.bf16 %v1701, %v1701
  %v1703 = vld [vmem:[%s11 + $0x10] sm:$0xf]
  %v1704 = vld [vmem:[%s11 + $0x14] sm:$0xf]
  %v1705 = vld [vmem:[%s11 + $0x18] sm:$0xf]
  %v1706 = vld [vmem:[%s11 + $0x1c] sm:$0xf]
  %v1707 = vld [vmem:[%s2] sm:$0x3]
  %v1708 = vpack.c.bf16 %v1707, %v1707
  %v1709 = vld [vmem:[%s11 + $0x20] sm:$0xf]
  %v1710 = vld [vmem:[%s11 + $0x24] sm:$0xf]
  %v1711 = vld [vmem:[%s11 + $0x28] sm:$0xf]
  %v1712 = vld [vmem:[%s11 + $0x2c] sm:$0xf]
  %v1717 = vunpack.c.l.b16 %v1709
  %v1718 = vunpack.c.l.b16 %v1710
  %v1719 = vunpack.c.l.b16 %v1711
  %v1720 = vunpack.c.l.b16 %v1712
  %v1721 = vpack.c.b16 %v1718, %v1717
  %v1722 = vpack.c.b16 %v1720, %v1719
  %v1726 = vsel %vm163, %v1708, 0
  %1728 = vmatprep.subr.bf16.mxu0 0
  %1729 = vmatpush1.bf16.msra.mxu0 0
  %1730 = vmatprep.subr.bf16.mxu0 0
  %1731 = vmatpush1.bf16.msra.mxu0 0
  %1732 = vmatprep.subr.bf16.mxu0 0
  %1733 = vmatpush1.bf16.msra.mxu0 0
  %1734 = vmatprep.subr.bf16.mxu0 0
  %1735 = vmatpush1.bf16.msra.mxu0 0
  %1736 = vmatprep.subr.bf16.mxu0 0
  %1737 = vmatpush1.bf16.msra.mxu0 0
  %1738 = vmatprep.subr.bf16.mxu0 0
  %1739 = vmatpush1.bf16.msra.mxu0 0
  %1740 = vmatprep.subr.bf16.mxu0 0
  %1741 = vmatpush1.bf16.msra.mxu0 %v1722
  %1742 = vmatprep.subr.bf16.mxu0 0
  %1743 = vmatpush1.bf16.msra.mxu0 %v1721
  %1744 = vmatprep.subr.bf16.mxu0 0
  %1745 = vmatpush2.bf16.msra.mxu0 0
  %1746 = vmatprep.subr.bf16.mxu0 0
  %1747 = vmatpush2.bf16.msra.mxu0 0
  %1748 = vmatprep.subr.bf16.mxu0 0
  %1749 = vmatpush2.bf16.msra.mxu0 0
  %1750 = vmatprep.subr.bf16.mxu0 0
  %1751 = vmatpush2.bf16.msra.mxu0 0
  %1752 = vmatprep.subr.bf16.mxu0 0
  %1753 = vmatpush2.bf16.msra.mxu0 0
  %1754 = vmatprep.subr.bf16.mxu0 0
  %1755 = vmatpush2.bf16.msra.mxu0 0
  %1756 = vmatprep.subr.bf16.mxu0 0
  %1757 = vmatpush2.bf16.msra.mxu0 0
  %1758 = vmatprep.subr.bf16.mxu0 0
  %1759 = vmatpush2.bf16.msra.mxu0 0
  %1760 = vmatprep.mubr.bf16.mxu0 0
  %1761 = vmatmul.mubr.bf16.gmra.mxu0 %v1726
  %v1762 = vpop.f32.mrf.mxu0
  %v1763 = vadd.f32 0.0, %v1762
  %v1764 = vpop.f32.mrf.mxu0
  %v1765 = vpop.f32.mrf.mxu0
  %v1766 = vpop.f32.mrf.mxu0
  %1767 = vdwg.mxu0
  %v1772 = vunpack.c.l.b16 %v1703
  %v1773 = vunpack.c.l.b16 %v1704
  %v1774 = vunpack.c.l.b16 %v1705
  %v1775 = vunpack.c.l.b16 %v1706
  %v1776 = vpack.c.b16 %v1773, %v1772
  %v1777 = vpack.c.b16 %v1775, %v1774
  %v1781 = vsel %vm163, %v1702, 0
  %1783 = vmatprep.subr.bf16.mxu0 0
  %1784 = vmatpush1.bf16.msra.mxu0 0
  %1785 = vmatprep.subr.bf16.mxu0 0
  %1786 = vmatpush1.bf16.msra.mxu0 0
  %1787 = vmatprep.subr.bf16.mxu0 0
  %1788 = vmatpush1.bf16.msra.mxu0 0
  %1789 = vmatprep.subr.bf16.mxu0 0
  %1790 = vmatpush1.bf16.msra.mxu0 0
  %1791 = vmatprep.subr.bf16.mxu0 0
  %1792 = vmatpush1.bf16.msra.mxu0 0
  %1793 = vmatprep.subr.bf16.mxu0 0
  %1794 = vmatpush1.bf16.msra.mxu0 0
  %1795 = vmatprep.subr.bf16.mxu0 0
  %1796 = vmatpush1.bf16.msra.mxu0 %v1777
  %1797 = vmatprep.subr.bf16.mxu0 0
  %1798 = vmatpush1.bf16.msra.mxu0 %v1776
  %1799 = vmatprep.subr.bf16.mxu0 0
  %1800 = vmatpush2.bf16.msra.mxu0 0
  %1801 = vmatprep.subr.bf16.mxu0 0
  %1802 = vmatpush2.bf16.msra.mxu0 0
  %1803 = vmatprep.subr.bf16.mxu0 0
  %1804 = vmatpush2.bf16.msra.mxu0 0
  %1805 = vmatprep.subr.bf16.mxu0 0
  %1806 = vmatpush2.bf16.msra.mxu0 0
  %1807 = vmatprep.subr.bf16.mxu0 0
  %1808 = vmatpush2.bf16.msra.mxu0 0
  %1809 = vmatprep.subr.bf16.mxu0 0
  %1810 = vmatpush2.bf16.msra.mxu0 0
  %1811 = vmatprep.subr.bf16.mxu0 0
  %1812 = vmatpush2.bf16.msra.mxu0 0
  %1813 = vmatprep.subr.bf16.mxu0 0
  %1814 = vmatpush2.bf16.msra.mxu0 0
  %1815 = vmatprep.mubr.bf16.mxu0 0
  %1816 = vmatmul.mubr.bf16.gmra.mxu0 %v1781
  %v1817 = vpop.f32.mrf.mxu0
  %v1818 = vadd.f32 %v1763, %v1817
  %v1819 = vpop.f32.mrf.mxu0
  %v1820 = vpop.f32.mrf.mxu0
  %v1821 = vpop.f32.mrf.mxu0
  %1822 = vdwg.mxu0
  %v1823 = vlaneseq
  %v1824 = vshrl.u32 %v1823, 7
  %v1825 = vsub.s32 3, %v1824
  %v1826 = vrot.slane %v42, %v1825
  %v1827 = vadd.f32 %v1818, %v1826
  %v1828 = vmax.f32 %v1827, 0.0
  %v1829 = vpack.c.bf16 %v1828, %v1828
  %v1830 = vld [vmem:[%s11 + $0x30] sm:$0xf]
  %v1831 = vld [vmem:[%s11 + $0x34] sm:$0xf]
  %v1832 = vld [vmem:[%s11 + $0x38] sm:$0xf]
  %v1833 = vld [vmem:[%s11 + $0x3c] sm:$0xf]
  %v1834 = vlaneseq
  %v1835 = vshrl.u32 %v1834, 7
  %v1836 = vsub.s32 4, %v1835
  %v1837 = vrot.slane %v42, %v1836
  %v1842 = vunpack.c.l.b16 %v1830
  %v1843 = vunpack.c.l.b16 %v1831
  %v1844 = vunpack.c.l.b16 %v1832
  %v1845 = vunpack.c.l.b16 %v1833
  %v1846 = vpack.c.b16 %v1843, %v1842
  %v1847 = vpack.c.b16 %v1845, %v1844
  %v1851 = vsel %vm163, %v1829, 0
  %1853 = vmatprep.subr.bf16.mxu0 0
  %1854 = vmatpush1.bf16.msra.mxu0 0
  %1855 = vmatprep.subr.bf16.mxu0 0
  %1856 = vmatpush1.bf16.msra.mxu0 0
  %1857 = vmatprep.subr.bf16.mxu0 0
  %1858 = vmatpush1.bf16.msra.mxu0 0
  %1859 = vmatprep.subr.bf16.mxu0 0
  %1860 = vmatpush1.bf16.msra.mxu0 0
  %1861 = vmatprep.subr.bf16.mxu0 0
  %1862 = vmatpush1.bf16.msra.mxu0 0
  %1863 = vmatprep.subr.bf16.mxu0 0
  %1864 = vmatpush1.bf16.msra.mxu0 0
  %1865 = vmatprep.subr.bf16.mxu0 0
  %1866 = vmatpush1.bf16.msra.mxu0 %v1847
  %1867 = vmatprep.subr.bf16.mxu0 0
  %1868 = vmatpush1.bf16.msra.mxu0 %v1846
  %1869 = vmatprep.subr.bf16.mxu0 0
  %1870 = vmatpush2.bf16.msra.mxu0 0
  %1871 = vmatprep.subr.bf16.mxu0 0
  %1872 = vmatpush2.bf16.msra.mxu0 0
  %1873 = vmatprep.subr.bf16.mxu0 0
  %1874 = vmatpush2.bf16.msra.mxu0 0
  %1875 = vmatprep.subr.bf16.mxu0 0
  %1876 = vmatpush2.bf16.msra.mxu0 0
  %1877 = vmatprep.subr.bf16.mxu0 0
  %1878 = vmatpush2.bf16.msra.mxu0 0
  %1879 = vmatprep.subr.bf16.mxu0 0
  %1880 = vmatpush2.bf16.msra.mxu0 0
  %1881 = vmatprep.subr.bf16.mxu0 0
  %1882 = vmatpush2.bf16.msra.mxu0 0
  %1883 = vmatprep.subr.bf16.mxu0 0
  %1884 = vmatpush2.bf16.msra.mxu0 0
  %1885 = vmatprep.mubr.bf16.mxu0 0
  %1886 = vmatmul.mubr.bf16.gmra.mxu0 %v1851
  %v1887 = vpop.f32.mrf.mxu0
  %v1888 = vadd.f32 %v1837, %v1887
  %v1889 = vpop.f32.mrf.mxu0
  %v1890 = vpop.f32.mrf.mxu0
  %v1891 = vpop.f32.mrf.mxu0
  %1892 = vdwg.mxu0
  %v1893 = vxor.u32 %v1888, 2147483648
  %v1894 = vmul.f32 %v1893, 1.442695
  %v1895 = vpow.pop %v1894
  %v1896 = vadd.f32 %v1895, 1.0
  %v1897 = vrcp.pop %v1896
  %v1898 = vmul.f32 1.0, %v1897
  %vm1899 = vcmask 25600
  %1900 = vst.msk [vmem:[%s12] sm:$0x3] %vm1899, %v1898
  %v1901 = vtanh.pop %v1888
  %v1902 = vadd.f32 %v1901, 1.0
  %v1903 = vmul.f32 %v1902, 0.5
  %vm1904 = vcmask 58400
  %1905 = vst.msk [vmem:[%s12] sm:$0x3] %vm1904, %v1903
  // Predicated region
  $region50: #{emotion_model_forward.1} parent=0 // pred_check
    _
  $region51: #{emotion_model_forward.1} parent=0 // pred_check_branch
    %1907 = sbr.rel (0) target = $region53
  $region52: #{emotion_model_forward.1} parent=0 // pred_region
    _
  $region53: #{emotion_model_forward.1} parent=0 // pred_fallthru
    _
  // Predicated region
  $region54: #{emotion_model_forward.1} parent=0 // pred_check
    _
  $region55: #{emotion_model_forward.1} parent=0 // pred_check_branch
    %1909 = sbr.rel (0) target = $region57
  $region56: #{emotion_model_forward.1} parent=0 // pred_region
    _
  $region57: #{emotion_model_forward.1} parent=0 // pred_fallthru
    _

</llo_original>
